<compile_context>
chip_gen: v7x
topology: tpu7x:2x2x1
jax: 0.10.0
libtpu: 0.0.40
codegen_flags: <defaults>
</compile_context>

<pallas_src>
import jax
import jax.numpy as jnp
from jax.experimental import pallas as pl
from jax.experimental.pallas import tpu as pltpu

EPS = 1e-5


# ---------------------------------------------------------------------------
# Pallas kernels
# ---------------------------------------------------------------------------
def _matmul_stats_kernel(a_ref, b_ref, y_ref, sum_ref, sq_ref):
    """y = A_tile @ B; emit per-tile per-column partial sum / sum-of-squares."""
    y = jnp.dot(a_ref[...], b_ref[...], preferred_element_type=jnp.float32)
    y_ref[...] = y
    tm, c = y.shape                        # static block shape (tm % 8 == 0)
    yf = y.reshape(tm // 8, 8, c)          # regroup whole vregs; no data movement
    sum_ref[...] = jnp.sum(yf, axis=0)     # (8, c) partial column sums
    sq_ref[...] = jnp.sum(yf * yf, axis=0)


def _bn_prelu_kernel(y_ref, scale_ref, shift_ref, alpha_ref, o_ref):
    """z = y * scale + shift (precomputed BN affine); PReLU(z)."""
    z = y_ref[...] * scale_ref[...] + shift_ref[...]
    alpha = alpha_ref[0, 0]
    o_ref[...] = jnp.where(z >= 0, z, alpha * z)


# ---------------------------------------------------------------------------
# Wrapper
# ---------------------------------------------------------------------------
def conv_t_block(x_nchw, w_t, bias, gamma, beta, alpha):
    """ConvTBlock forward.

    x_nchw : (N, Cin, H, W)    float32
    w_t    : (Cin, Cout, 3, 3) ConvTranspose2d weight (PyTorch layout)
    bias   : (Cout,)           ConvTranspose2d bias (mathematically cancelled by
                               train-mode BatchNorm mean subtraction -> unused)
    gamma, beta : (Cout,)      BatchNorm2d affine params
    alpha  : scalar            PReLU weight (num_parameters=1)
    returns: (N, Cout, 2H, 2W) float32, NCHW
    """
    del bias  # cancelled exactly by batch-stats BatchNorm (see header note)

    N, Cin, H, W = x_nchw.shape
    Cout = w_t.shape[1]
    Hout, Wout = 2 * H, 2 * W
    M_in = N * H * W                       # rows of the phase matmul
    M_total = N * Hout * Wout              # true BN reduction count (= 4*M_in)
    K = 4 * Cin
    C4 = 4 * Cout
    Cpad = ((C4 + 127) // 128) * 128       # lane-dense output columns

    # Row tile / grid (pad M with zero rows; zero rows do not perturb BN stats).
    TM = 512
    if M_in < TM:
        TM = ((M_in + 7) // 8) * 8
    G = pl.cdiv(M_in, TM)
    M_pad = G * TM

    # ---- glue: 4-tap operand A = [x(j,k), x(j,k+1), x(j+1,k), x(j+1,k+1)] -----
    x = jnp.transpose(x_nchw, (0, 2, 3, 1)).astype(jnp.float32)      # NHWC
    xp = jnp.pad(x, ((0, 0), (0, 1), (0, 1), (0, 0)))                # (N,H+1,W+1,Cin)
    a = jnp.concatenate(
        [xp[:, :H, :W, :], xp[:, :H, 1:, :], xp[:, 1:, :W, :], xp[:, 1:, 1:, :]],
        axis=-1).reshape(M_in, K)
    a = jnp.pad(a, ((0, M_pad - M_in), (0, 0)))

    # ---- glue: phase weight matrix B (4*Cin, Cpad); columns = [EE,EO,OE,OO] ----
    # Phase p = (ho%2)*2 + (wo%2); output[n, 2j+ph, 2k+pw, co] = A[n,j,k,:] @ B[:, p*Cout+co].
    wf = w_t.astype(jnp.float32)
    wk = lambda kh, kw: wf[:, :, kh, kw]                             # (Cin, Cout)
    z = jnp.zeros((Cin, Cout), jnp.float32)
    b = jnp.concatenate([
        jnp.concatenate([wk(1, 1), wk(1, 2), wk(2, 1), wk(2, 2)], axis=1),  # tap x(j,   k  )
        jnp.concatenate([z,        wk(1, 0), z,        wk(2, 0)], axis=1),  # tap x(j,   k+1)
        jnp.concatenate([z,        z,        wk(0, 1), wk(0, 2)], axis=1),  # tap x(j+1, k  )
        jnp.concatenate([z,        z,        z,        wk(0, 0)], axis=1),  # tap x(j+1, k+1)
    ], axis=0)
    b = jnp.pad(b, ((0, 0), (0, Cpad - C4)))

    # ---- Pallas pass 1: phase matmul with BN-stat partials fused in epilogue ---
    conv_out, part_sum, part_sq = pl.pallas_call(
        _matmul_stats_kernel,
        out_shape=(
            jax.ShapeDtypeStruct((M_pad, Cpad), jnp.float32),
            jax.ShapeDtypeStruct((G * 8, Cpad), jnp.float32),
            jax.ShapeDtypeStruct((G * 8, Cpad), jnp.float32),
        ),
        grid=(G,),
        in_specs=[
            pl.BlockSpec((TM, K), lambda i: (i, 0)),
            pl.BlockSpec((K, Cpad), lambda i: (0, 0)),   # weights stay resident in VMEM
        ],
        out_specs=(
            pl.BlockSpec((TM, Cpad), lambda i: (i, 0)),
            pl.BlockSpec((8, Cpad), lambda i: (i, 0)),
            pl.BlockSpec((8, Cpad), lambda i: (i, 0)),
        ),
        compiler_params=pltpu.CompilerParams(dimension_semantics=("parallel",)),
    )(a, b)

    # ---- glue: O(Cout) fold of per-tile partials -> fused BN scale / shift -----
    col_sum = jnp.sum(part_sum, axis=0)[:C4].reshape(4, Cout).sum(axis=0)
    col_sq = jnp.sum(part_sq, axis=0)[:C4].reshape(4, Cout).sum(axis=0)
    mean = col_sum / M_total
    var = jnp.maximum(col_sq / M_total - mean * mean, 0.0)   # biased variance
    scale = gamma.astype(jnp.float32) * jax.lax.rsqrt(var + EPS)
    shift = beta.astype(jnp.float32) - mean * scale
    scale_t = jnp.pad(jnp.tile(scale, 4), (0, Cpad - C4)).reshape(1, Cpad)
    shift_t = jnp.pad(jnp.tile(shift, 4), (0, Cpad - C4)).reshape(1, Cpad)
    alpha2d = jnp.asarray(alpha, jnp.float32).reshape(1, 1)

    # ---- Pallas pass 2: normalize + PReLU, gridded over M ("parallel") --------
    out_flat = pl.pallas_call(
        _bn_prelu_kernel,
        out_shape=jax.ShapeDtypeStruct((M_pad, Cpad), jnp.float32),
        grid=(G,),
        in_specs=[
            pl.BlockSpec((TM, Cpad), lambda i: (i, 0)),
            pl.BlockSpec((1, Cpad), lambda i: (0, 0)),
            pl.BlockSpec((1, Cpad), lambda i: (0, 0)),
            pl.BlockSpec((1, 1), lambda i: (0, 0)),
        ],
        out_specs=pl.BlockSpec((TM, Cpad), lambda i: (i, 0)),
        compiler_params=pltpu.CompilerParams(dimension_semantics=("parallel",)),
    )(conv_out, scale_t, shift_t, alpha2d)

    # ---- glue: un-phase + back to NCHW (required external layout) -------------
    y = out_flat[:M_in, :C4].reshape(N, H, W, 2, 2, Cout)
    return jnp.transpose(y, (0, 5, 1, 3, 2, 4)).reshape(N, Cout, Hout, Wout)


# ---------------------------------------------------------------------------
# Pure-JAX reference (sanity check only)
# ---------------------------------------------------------------------------
def _reference(x_nchw, w_t, bias, gamma, beta, alpha):
    w_conv = jnp.transpose(w_t[:, :, ::-1, ::-1], (1, 0, 2, 3))      # OIHW
    y = jax.lax.conv_general_dilated(
        x_nchw, w_conv,
        window_strides=(1, 1),
        padding=((1, 2), (1, 2)),
        lhs_dilation=(2, 2),
        rhs_dilation=(1, 1),
        dimension_numbers=("NCHW", "OIHW", "NCHW"),
    ) + bias[None, :, None, None]
    mean = jnp.mean(y, axis=(0, 2, 3), keepdims=True)
    var = jnp.mean((y - mean) ** 2, axis=(0, 2, 3), keepdims=True)
    z = (y - mean) * jax.lax.rsqrt(var + EPS)
    z = z * gamma[None, :, None, None] + beta[None, :, None, None]
    return jnp.where(z >= 0, z, alpha * z)


# ---------------------------------------------------------------------------
if __name__ == "__main__":
    N, Cin, Cout, H, W = 2, 4, 8, 16, 16

    key = jax.random.PRNGKey(0)
    kx, kw, kb, kg, kbt = jax.random.split(key, 5)

    x = jax.random.normal(kx, (N, Cin, H, W), jnp.float32)
    # ConvTranspose2d weight layout: (in_channels, out_channels, kH, kW)
    w_t = jax.random.normal(kw, (Cin, Cout, 3, 3), jnp.float32) * 0.2
    bias = jax.random.normal(kb, (Cout,), jnp.float32) * 0.1
    gamma = 1.0 + 0.1 * jax.random.normal(kg, (Cout,), jnp.float32)
    beta = 0.1 * jax.random.normal(kbt, (Cout,), jnp.float32)
    alpha = 0.25  # PReLU default init

    fn = jax.jit(conv_t_block)
    out = jax.block_until_ready(fn(x, w_t, bias, gamma, beta, alpha))

    ref = jax.block_until_ready(_reference(x, w_t, bias, gamma, beta, alpha))
    assert out.shape == (N, Cout, 2 * H, 2 * W), out.shape
    max_err = float(jnp.max(jnp.abs(out - ref)))
    assert jnp.allclose(out, ref, rtol=1e-3, atol=1e-3), max_err

    print("KERNEL_OK")
</pallas_src>

<mosaic_0001>
module attributes {stable_mosaic.version = 11 : i64} {
  func.func @_matmul_stats_kernel(%arg0: i32, %arg1: memref<512x16xf32, #tpu.memory_space<vmem>>, %arg2: memref<16x128xf32, #tpu.memory_space<vmem>>, %arg3: memref<512x128xf32, #tpu.memory_space<vmem>>, %arg4: memref<8x128xf32, #tpu.memory_space<vmem>>, %arg5: memref<8x128xf32, #tpu.memory_space<vmem>>) attributes {dimension_semantics = [#tpu.dimension_semantics<parallel>], iteration_bounds = array<i64: 1>, scalar_prefetch = 0 : i64, scratch_operands = 0 : i64, tpu.core_type = #tpu.core_type<tc>, window_params = [{transform_indices = @transform_0, window_bounds = array<i64: 512, 16>}, {pipeline_mode = #tpu.pipeline_mode<synchronous>, transform_indices = @transform_1, window_bounds = array<i64: 16, 128>}, {transform_indices = @transform_2, window_bounds = array<i64: 512, 128>}, {transform_indices = @transform_3, window_bounds = array<i64: 8, 128>}, {transform_indices = @transform_4, window_bounds = array<i64: 8, 128>}]} {
    %c0 = arith.constant 0 : index
    %c0_0 = arith.constant 0 : index
    %0 = vector.load %arg1[%c0, %c0_0] : memref<512x16xf32, #tpu.memory_space<vmem>>, vector<512x16xf32>
    %c0_1 = arith.constant 0 : index
    %c0_2 = arith.constant 0 : index
    %1 = vector.load %arg2[%c0_1, %c0_2] : memref<16x128xf32, #tpu.memory_space<vmem>>, vector<16x128xf32>
    %cst = arith.constant dense<0.000000e+00> : vector<512x128xf32>
    %2 = tpu.matmul %0, %1, %cst {dimension_numbers = #tpu.dot_dimension_numbers<[1], [0], [0], [1], [0, 0, 1, 1], [], []>} : vector<512x16xf32>, vector<16x128xf32>, vector<512x128xf32> -> vector<512x128xf32>
    %c0_3 = arith.constant 0 : index
    %c0_4 = arith.constant 0 : index
    %3 = vector.load %arg3[%c0_3, %c0_4] : memref<512x128xf32, #tpu.memory_space<vmem>>, vector<512x128xf32>
    tpu.vector_store %arg3[%c0_3, %c0_4], %2 {strides = array<i32>} : memref<512x128xf32, #tpu.memory_space<vmem>>, vector<512x128xf32>,
    %4 = vector.shape_cast %2 : vector<512x128xf32> to vector<64x8x128xf32>
    %cst_5 = arith.constant dense<0.000000e+00> : vector<8x128xf32>
    %5 = vector.multi_reduction <add>, %4, %cst_5 [0] : vector<64x8x128xf32> to vector<8x128xf32>
    %c0_6 = arith.constant 0 : index
    %c0_7 = arith.constant 0 : index
    %6 = vector.load %arg4[%c0_6, %c0_7] : memref<8x128xf32, #tpu.memory_space<vmem>>, vector<8x128xf32>
    tpu.vector_store %arg4[%c0_6, %c0_7], %5 {strides = array<i32>} : memref<8x128xf32, #tpu.memory_space<vmem>>, vector<8x128xf32>,
    %7 = arith.mulf %4, %4 : vector<64x8x128xf32>
    %cst_8 = arith.constant dense<0.000000e+00> : vector<8x128xf32>
    %8 = vector.multi_reduction <add>, %7, %cst_8 [0] : vector<64x8x128xf32> to vector<8x128xf32>
    %c0_9 = arith.constant 0 : index
    %c0_10 = arith.constant 0 : index
    %9 = vector.load %arg5[%c0_9, %c0_10] : memref<8x128xf32, #tpu.memory_space<vmem>>, vector<8x128xf32>
    tpu.vector_store %arg5[%c0_9, %c0_10], %8 {strides = array<i32>} : memref<8x128xf32, #tpu.memory_space<vmem>>, vector<8x128xf32>,
    return
  }
  func.func @transform_0(%arg0: i32) -> (i32, i32) {
    %c0_i32 = arith.constant 0 : i32
    %c0_i32_0 = arith.constant 0 : i32
    return %arg0, %c0_i32 : i32, i32
  }
  func.func @transform_1(%arg0: i32) -> (i32, i32) {
    %c0_i32 = arith.constant 0 : i32
    %c0_i32_0 = arith.constant 0 : i32
    %c0_i32_1 = arith.constant 0 : i32
    return %c0_i32, %c0_i32_0 : i32, i32
  }
  func.func @transform_2(%arg0: i32) -> (i32, i32) {
    %c0_i32 = arith.constant 0 : i32
    %c0_i32_0 = arith.constant 0 : i32
    return %arg0, %c0_i32 : i32, i32
  }
  func.func @transform_3(%arg0: i32) -> (i32, i32) {
    %c0_i32 = arith.constant 0 : i32
    %c0_i32_0 = arith.constant 0 : i32
    return %arg0, %c0_i32 : i32, i32
  }
  func.func @transform_4(%arg0: i32) -> (i32, i32) {
    %c0_i32 = arith.constant 0 : i32
    %c0_i32_0 = arith.constant 0 : i32
    return %arg0, %c0_i32 : i32, i32
  }
}

module attributes {stable_mosaic.version = 11 : i64} {
  func.func @_bn_prelu_kernel(%arg0: i32, %arg1: memref<512x128xf32, #tpu.memory_space<vmem>>, %arg2: memref<1x128xf32, #tpu.memory_space<vmem>>, %arg3: memref<1x128xf32, #tpu.memory_space<vmem>>, %arg4: memref<1x1xf32, #tpu.memory_space<vmem>>, %arg5: memref<512x128xf32, #tpu.memory_space<vmem>>) attributes {dimension_semantics = [#tpu.dimension_semantics<parallel>], iteration_bounds = array<i64: 1>, scalar_prefetch = 0 : i64, scratch_operands = 0 : i64, tpu.core_type = #tpu.core_type<tc>, window_params = [{transform_indices = @transform_0, window_bounds = array<i64: 512, 128>}, {pipeline_mode = #tpu.pipeline_mode<synchronous>, transform_indices = @transform_1, window_bounds = array<i64: 1, 128>}, {pipeline_mode = #tpu.pipeline_mode<synchronous>, transform_indices = @transform_2, window_bounds = array<i64: 1, 128>}, {pipeline_mode = #tpu.pipeline_mode<synchronous>, transform_indices = @transform_3, window_bounds = array<i64: 1, 1>}, {transform_indices = @transform_4, window_bounds = array<i64: 512, 128>}]} {
    %c0 = arith.constant 0 : index
    %c0_0 = arith.constant 0 : index
    %0 = vector.load %arg1[%c0, %c0_0] : memref<512x128xf32, #tpu.memory_space<vmem>>, vector<512x128xf32>
    %c0_1 = arith.constant 0 : index
    %c0_2 = arith.constant 0 : index
    %1 = vector.load %arg2[%c0_1, %c0_2] : memref<1x128xf32, #tpu.memory_space<vmem>>, vector<1x128xf32>
    %2 = vector.broadcast %1 : vector<1x128xf32> to vector<512x128xf32>
    %3 = arith.mulf %0, %2 : vector<512x128xf32>
    %c0_3 = arith.constant 0 : index
    %c0_4 = arith.constant 0 : index
    %4 = vector.load %arg3[%c0_3, %c0_4] : memref<1x128xf32, #tpu.memory_space<vmem>>, vector<1x128xf32>
    %5 = vector.broadcast %4 : vector<1x128xf32> to vector<512x128xf32>
    %6 = arith.addf %3, %5 : vector<512x128xf32>
    %c0_5 = arith.constant 0 : index
    %c0_6 = arith.constant 0 : index
    %7 = vector.load %arg4[%c0_5, %c0_6] : memref<1x1xf32, #tpu.memory_space<vmem>>, vector<1x1xf32>
    %8 = vector.extract %7[0, 0] : f32 from vector<1x1xf32>
    %cst = arith.constant 0.000000e+00 : f32
    %9 = vector.broadcast %cst : f32 to vector<512x128xf32>
    %10 = arith.cmpf oge, %6, %9 : vector<512x128xf32>
    %11 = vector.broadcast %8 : f32 to vector<512x128xf32>
    %12 = arith.mulf %11, %6 : vector<512x128xf32>
    %13 = arith.select %10, %6, %12 : vector<512x128xi1>, vector<512x128xf32>
    %c0_7 = arith.constant 0 : index
    %c0_8 = arith.constant 0 : index
    %14 = vector.load %arg5[%c0_7, %c0_8] : memref<512x128xf32, #tpu.memory_space<vmem>>, vector<512x128xf32>
    tpu.vector_store %arg5[%c0_7, %c0_8], %13 {strides = array<i32>} : memref<512x128xf32, #tpu.memory_space<vmem>>, vector<512x128xf32>,
    return
  }
  func.func @transform_0(%arg0: i32) -> (i32, i32) {
    %c0_i32 = arith.constant 0 : i32
    %c0_i32_0 = arith.constant 0 : i32
    return %arg0, %c0_i32 : i32, i32
  }
  func.func @transform_1(%arg0: i32) -> (i32, i32) {
    %c0_i32 = arith.constant 0 : i32
    %c0_i32_0 = arith.constant 0 : i32
    %c0_i32_1 = arith.constant 0 : i32
    return %c0_i32, %c0_i32_0 : i32, i32
  }
  func.func @transform_2(%arg0: i32) -> (i32, i32) {
    %c0_i32 = arith.constant 0 : i32
    %c0_i32_0 = arith.constant 0 : i32
    %c0_i32_1 = arith.constant 0 : i32
    return %c0_i32, %c0_i32_0 : i32, i32
  }
  func.func @transform_3(%arg0: i32) -> (i32, i32) {
    %c0_i32 = arith.constant 0 : i32
    %c0_i32_0 = arith.constant 0 : i32
    %c0_i32_1 = arith.constant 0 : i32
    return %c0_i32, %c0_i32_0 : i32, i32
  }
  func.func @transform_4(%arg0: i32) -> (i32, i32) {
    %c0_i32 = arith.constant 0 : i32
    %c0_i32_0 = arith.constant 0 : i32
    return %arg0, %c0_i32 : i32, i32
  }
}

</mosaic_0001>

<llo_original>
// kernel: tile.18
$region0: #{tile.18}
  #allocation0 [shape = 's32[1]{0}', space=sflag, size = 0x4, scoped, tag = 'scoped memory for tile.18']
  %s0 = inlined_call_operand.vmem [shape: f32[8], index: 0, kind: input, shape index: {}]
  %s1 = inlined_call_operand.vmem [shape: f32[4,8], index: 1, kind: output, shape index: {}]
  // Predicated region
  $region2: #{tile.18} parent=0 // pred_check
    _
  $region3: #{tile.18} parent=0 // pred_check_branch
    %3 = sbr.rel (0) target = $region5
  $region4: #{tile.18} parent=0 // pred_region
    _
  $region5: #{tile.18} parent=0 // pred_fallthru
    _
  %v4 = vld [vmem:[%s0] ss:$0 sm:$0xff]
  %5 = vst [vmem:[%s1] sm:$0xf] %v4

// kernel: tile.19
$region0: #{tile.19}
  %s0 = inlined_call_operand.vmem [shape: f32[4,8], index: 0, kind: input, shape index: {}]
  %s1 = inlined_call_operand.vmem [shape: f32[32], index: 1, kind: output, shape index: {}]
  $region1: #{tile.19} parent=0
    #allocation0 [shape = 'u8[4096]{0}', space=vmem, size = 0x1000, scoped, tag = 'scoped mem for output reshape']
    #allocation1 [shape = 'u8[4096]{0}', space=vmem, size = 0x1000, scoped, tag = 'scoped mem for input reshape']
    %s3 = sshllo.u32 0, 4
    %v4 = vld [vmem:[%s0] sm:%s3]
    %5 = vst [vmem:[#allocation1] sm:%s3] %v4
    %v6 = vld [vmem:[#allocation1] sm:$0x1]
    %vm7 = vcmask 64512
    %8 = vst.msk [vmem:[#allocation0] sm:$0x1] %vm7, %v6
    %s9 = scalar_lea.vmem [#allocation1], 3
    %v10 = vld [vmem:[%s9] sm:$0x1]
    %11 = vrot.lane.b32.xlu0 %v10, 24
    %v12 = vpop.permute.xlu0 %11
    %vm13 = vcmask 261312
    %14 = vst.msk [vmem:[#allocation0] sm:$0x1] %vm13, %v12
    %s15 = scalar_lea.vmem [#allocation1], 2
    %v16 = vld [vmem:[%s15] sm:$0x1]
    %17 = vrot.lane.b32.xlu0 %v16, 16
    %v18 = vpop.permute.xlu0 %17
    %vm19 = vcmask 195712
    %20 = vst.msk [vmem:[#allocation0] sm:$0x1] %vm19, %v18
    %s21 = scalar_lea.vmem [#allocation1], 1
    %v22 = vld [vmem:[%s21] sm:$0x1]
    %23 = vrot.lane.b32.xlu0 %v22, 8
    %v24 = vpop.permute.xlu0 %23
    %vm25 = vcmask 130112
    %26 = vst.msk [vmem:[#allocation0] sm:$0x1] %vm25, %v24
    %s28 = sshllo.u32 0, 1
    %v30 = vld [vmem:[#allocation0] sm:%s28]
    %s31 = sshllo.u32 0, 1
    %32 = vst [vmem:[%s1] sm:%s31] %v30

// kernel: conv_t_block.2
$region0: #{conv_t_block.2}
  #allocation0 [shape = 'u32[]', space=smem, size = 0x4, offset = 0x4, fixed_abs, tag = 'smem constant byte address 0x4 - core index']
  #allocation1 [shape = 'u32[144,128]{1,0:T(1,128)}', space=vmem, size = 0x12000, scoped, tag = 'internal scratch']
  %s0 = inlined_call_operand.vmem [shape: f32[512,16], index: 0, kind: input, shape index: {}]
  %s1 = inlined_call_operand.vmem [shape: f32[16,128], index: 1, kind: input, shape index: {}]
  %s2 = inlined_call_operand.vmem [shape: f32[512,128], index: 2, kind: output, shape index: {0}]
  %s3 = inlined_call_operand.vmem [shape: f32[8,128], index: 3, kind: output, shape index: {1}]
  %s4 = inlined_call_operand.vmem [shape: f32[8,128], index: 4, kind: output, shape index: {2}]
  %5 = xla_tuple %s2, %s3, %s4
  %s6 = sld [smem:[#allocation0]]
  $region34: #{conv_t_block.2} parent=0
    _
  %s8 = ssub.s32 1, %s6
  %s9 = scalar_select 0, %s8, %s6
  // Predicated region
  $region2: #{conv_t_block.2} parent=0 // pred_check
    _
  $region3: #{conv_t_block.2} parent=0 // pred_check_branch
    %11 = sbr.rel (0) target = $region5
  $region4: #{conv_t_block.2} parent=0 // pred_region
    _
  $region5: #{conv_t_block.2} parent=0 // pred_fallthru
    _
  // Predicated region
  $region6: #{conv_t_block.2} parent=0 // pred_check
    _
  $region7: #{conv_t_block.2} parent=0 // pred_check_branch
    %13 = sbr.rel (0) target = $region9
  $region8: #{conv_t_block.2} parent=0 // pred_region
    _
  $region9: #{conv_t_block.2} parent=0 // pred_fallthru
    _
  %v14 = vld [vmem:[%s0] sm:$0xff]
  %v15 = vld [vmem:[%s0 + $0x8] sm:$0xff]
  %v16 = vld [vmem:[%s0 + $0x10] sm:$0xff]
  %v17 = vld [vmem:[%s0 + $0x18] sm:$0xff]
  %v18 = vld [vmem:[%s0 + $0x20] sm:$0xff]
  %v19 = vld [vmem:[%s0 + $0x28] sm:$0xff]
  %v20 = vld [vmem:[%s0 + $0x30] sm:$0xff]
  %v21 = vld [vmem:[%s0 + $0x38] sm:$0xff]
  %v22 = vld [vmem:[%s0 + $0x40] sm:$0xff]
  %v23 = vld [vmem:[%s0 + $0x48] sm:$0xff]
  %v24 = vld [vmem:[%s0 + $0x50] sm:$0xff]
  %v25 = vld [vmem:[%s0 + $0x58] sm:$0xff]
  %v26 = vld [vmem:[%s0 + $0x60] sm:$0xff]
  %v27 = vld [vmem:[%s0 + $0x68] sm:$0xff]
  %v28 = vld [vmem:[%s0 + $0x70] sm:$0xff]
  %v29 = vld [vmem:[%s0 + $0x78] sm:$0xff]
  %v30 = vld [vmem:[%s0 + $0x80] sm:$0xff]
  %v31 = vld [vmem:[%s0 + $0x88] sm:$0xff]
  %v32 = vld [vmem:[%s0 + $0x90] sm:$0xff]
  %v33 = vld [vmem:[%s0 + $0x98] sm:$0xff]
  %v34 = vld [vmem:[%s0 + $0xa0] sm:$0xff]
  %v35 = vld [vmem:[%s0 + $0xa8] sm:$0xff]
  %v36 = vld [vmem:[%s0 + $0xb0] sm:$0xff]
  %v37 = vld [vmem:[%s0 + $0xb8] sm:$0xff]
  %v38 = vld [vmem:[%s0 + $0xc0] sm:$0xff]
  %v39 = vld [vmem:[%s0 + $0xc8] sm:$0xff]
  %v40 = vld [vmem:[%s0 + $0xd0] sm:$0xff]
  %v41 = vld [vmem:[%s0 + $0xd8] sm:$0xff]
  %v42 = vld [vmem:[%s0 + $0xe0] sm:$0xff]
  %v43 = vld [vmem:[%s0 + $0xe8] sm:$0xff]
  %v44 = vld [vmem:[%s0 + $0xf0] sm:$0xff]
  %v45 = vld [vmem:[%s0 + $0xf8] sm:$0xff]
  %v46 = vld [vmem:[%s0 + $0x100] sm:$0xff]
  %v47 = vld [vmem:[%s0 + $0x108] sm:$0xff]
  %v48 = vld [vmem:[%s0 + $0x110] sm:$0xff]
  %v49 = vld [vmem:[%s0 + $0x118] sm:$0xff]
  %v50 = vld [vmem:[%s0 + $0x120] sm:$0xff]
  %v51 = vld [vmem:[%s0 + $0x128] sm:$0xff]
  %v52 = vld [vmem:[%s0 + $0x130] sm:$0xff]
  %v53 = vld [vmem:[%s0 + $0x138] sm:$0xff]
  %v54 = vld [vmem:[%s0 + $0x140] sm:$0xff]
  %v55 = vld [vmem:[%s0 + $0x148] sm:$0xff]
  %v56 = vld [vmem:[%s0 + $0x150] sm:$0xff]
  %v57 = vld [vmem:[%s0 + $0x158] sm:$0xff]
  %v58 = vld [vmem:[%s0 + $0x160] sm:$0xff]
  %v59 = vld [vmem:[%s0 + $0x168] sm:$0xff]
  %v60 = vld [vmem:[%s0 + $0x170] sm:$0xff]
  %v61 = vld [vmem:[%s0 + $0x178] sm:$0xff]
  %v62 = vld [vmem:[%s0 + $0x180] sm:$0xff]
  %v63 = vld [vmem:[%s0 + $0x188] sm:$0xff]
  %v64 = vld [vmem:[%s0 + $0x190] sm:$0xff]
  %v65 = vld [vmem:[%s0 + $0x198] sm:$0xff]
  %v66 = vld [vmem:[%s0 + $0x1a0] sm:$0xff]
  %v67 = vld [vmem:[%s0 + $0x1a8] sm:$0xff]
  %v68 = vld [vmem:[%s0 + $0x1b0] sm:$0xff]
  %v69 = vld [vmem:[%s0 + $0x1b8] sm:$0xff]
  %v70 = vld [vmem:[%s0 + $0x1c0] sm:$0xff]
  %v71 = vld [vmem:[%s0 + $0x1c8] sm:$0xff]
  %v72 = vld [vmem:[%s0 + $0x1d0] sm:$0xff]
  %v73 = vld [vmem:[%s0 + $0x1d8] sm:$0xff]
  %v74 = vld [vmem:[%s0 + $0x1e0] sm:$0xff]
  %v75 = vld [vmem:[%s0 + $0x1e8] sm:$0xff]
  %v76 = vld [vmem:[%s0 + $0x1f0] sm:$0xff]
  %v77 = vld [vmem:[%s0 + $0x1f8] sm:$0xff]
  %v78 = vld [vmem:[%s1] sm:$0xff]
  %v79 = vld [vmem:[%s1 + $0x8] sm:$0xff]
  %vm80 = vcmask 130048
  %v82 = vsel %vm80, %v14, 0
  %v85 = vsel %vm80, %v15, 0
  %v88 = vsel %vm80, %v16, 0
  %v91 = vsel %vm80, %v17, 0
  %v94 = vsel %vm80, %v18, 0
  %v97 = vsel %vm80, %v19, 0
  %v100 = vsel %vm80, %v20, 0
  %v103 = vsel %vm80, %v21, 0
  %v106 = vsel %vm80, %v22, 0
  %v109 = vsel %vm80, %v23, 0
  %v112 = vsel %vm80, %v24, 0
  %v115 = vsel %vm80, %v25, 0
  %v118 = vsel %vm80, %v26, 0
  %v121 = vsel %vm80, %v27, 0
  %v124 = vsel %vm80, %v28, 0
  %v127 = vsel %vm80, %v29, 0
  %v130 = vsel %vm80, %v30, 0
  %v133 = vsel %vm80, %v31, 0
  %v136 = vsel %vm80, %v32, 0
  %v139 = vsel %vm80, %v33, 0
  %v142 = vsel %vm80, %v34, 0
  %v145 = vsel %vm80, %v35, 0
  %v148 = vsel %vm80, %v36, 0
  %v151 = vsel %vm80, %v37, 0
  %v154 = vsel %vm80, %v38, 0
  %v157 = vsel %vm80, %v39, 0
  %v160 = vsel %vm80, %v40, 0
  %v163 = vsel %vm80, %v41, 0
  %v166 = vsel %vm80, %v42, 0
  %v169 = vsel %vm80, %v43, 0
  %v172 = vsel %vm80, %v44, 0
  %v175 = vsel %vm80, %v45, 0
  %v178 = vsel %vm80, %v46, 0
  %v181 = vsel %vm80, %v47, 0
  %v184 = vsel %vm80, %v48, 0
  %v187 = vsel %vm80, %v49, 0
  %v190 = vsel %vm80, %v50, 0
  %v193 = vsel %vm80, %v51, 0
  %v196 = vsel %vm80, %v52, 0
  %v199 = vsel %vm80, %v53, 0
  %v202 = vsel %vm80, %v54, 0
  %v205 = vsel %vm80, %v55, 0
  %v208 = vsel %vm80, %v56, 0
  %v211 = vsel %vm80, %v57, 0
  %v214 = vsel %vm80, %v58, 0
  %v217 = vsel %vm80, %v59, 0
  %v220 = vsel %vm80, %v60, 0
  %v223 = vsel %vm80, %v61, 0
  %v226 = vsel %vm80, %v62, 0
  %v229 = vsel %vm80, %v63, 0
  %v232 = vsel %vm80, %v64, 0
  %v235 = vsel %vm80, %v65, 0
  %v238 = vsel %vm80, %v66, 0
  %v241 = vsel %vm80, %v67, 0
  %v244 = vsel %vm80, %v68, 0
  %v247 = vsel %vm80, %v69, 0
  %v250 = vsel %vm80, %v70, 0
  %v253 = vsel %vm80, %v71, 0
  %v256 = vsel %vm80, %v72, 0
  %v259 = vsel %vm80, %v73, 0
  %v262 = vsel %vm80, %v74, 0
  %v265 = vsel %vm80, %v75, 0
  %v268 = vsel %vm80, %v76, 0
  %v271 = vsel %vm80, %v77, 0
  %273 = vmatprep.subr.mxu0 0.0
  %274 = vmatpush1.msra.mxu0 %v78
  %275 = vmatprep.subr.mxu0 0.0
  %276 = vmatpush1.msra.mxu0 %v79
  %277 = vmatprep.subr.mxu0 0.0
  %278 = vmatpush1.msra.mxu0 0.0
  %279 = vmatprep.subr.mxu0 0.0
  %280 = vmatpush1.msra.mxu0 0.0
  %281 = vmatprep.subr.mxu0 0.0
  %282 = vmatpush1.msra.mxu0 0.0
  %283 = vmatprep.subr.mxu0 0.0
  %284 = vmatpush1.msra.mxu0 0.0
  %285 = vmatprep.subr.mxu0 0.0
  %286 = vmatpush1.msra.mxu0 0.0
  %287 = vmatprep.subr.mxu0 0.0
  %288 = vmatpush1.msra.mxu0 0.0
  %289 = vmatprep.subr.mxu0 0.0
  %290 = vmatpush1.msra.mxu0 0.0
  %291 = vmatprep.subr.mxu0 0.0
  %292 = vmatpush1.msra.mxu0 0.0
  %293 = vmatprep.subr.mxu0 0.0
  %294 = vmatpush1.msra.mxu0 0.0
  %295 = vmatprep.subr.mxu0 0.0
  %296 = vmatpush1.msra.mxu0 0.0
  %297 = vmatprep.subr.mxu0 0.0
  %298 = vmatpush1.msra.mxu0 0.0
  %299 = vmatprep.subr.mxu0 0.0
  %300 = vmatpush1.msra.mxu0 0.0
  %301 = vmatprep.subr.mxu0 0.0
  %302 = vmatpush1.msra.mxu0 0.0
  %303 = vmatprep.subr.mxu0 0.0
  %304 = vmatpush1.msra.mxu0 0.0
  %305 = vmatprep.subr.mxu0 0.0
  %306 = vmatpush1.msra.mxu0 0.0
  %307 = vmatprep.subr.mxu0 0.0
  %308 = vmatpush1.msra.mxu0 0.0
  %309 = vmatprep.subr.mxu0 0.0
  %310 = vmatpush1.msra.mxu0 0.0
  %311 = vmatprep.subr.mxu0 0.0
  %312 = vmatpush1.msra.mxu0 0.0
  %313 = vmatprep.subr.mxu0 0.0
  %314 = vmatpush1.msra.mxu0 0.0
  %315 = vmatprep.subr.mxu0 0.0
  %316 = vmatpush1.msra.mxu0 0.0
  %317 = vmatprep.subr.mxu0 0.0
  %318 = vmatpush1.msra.mxu0 0.0
  %319 = vmatprep.subr.mxu0 0.0
  %320 = vmatpush1.msra.mxu0 0.0
  %321 = vmatprep.subr.mxu0 0.0
  %322 = vmatpush1.msra.mxu0 0.0
  %323 = vmatprep.subr.mxu0 0.0
  %324 = vmatpush1.msra.mxu0 0.0
  %325 = vmatprep.subr.mxu0 0.0
  %326 = vmatpush1.msra.mxu0 0.0
  %327 = vmatprep.subr.mxu0 0.0
  %328 = vmatpush1.msra.mxu0 0.0
  %329 = vmatprep.subr.mxu0 0.0
  %330 = vmatpush1.msra.mxu0 0.0
  %331 = vmatprep.subr.mxu0 0.0
  %332 = vmatpush1.msra.mxu0 0.0
  %333 = vmatprep.subr.mxu0 0.0
  %334 = vmatpush1.msra.mxu0 0.0
  %335 = vmatprep.subr.mxu0 0.0
  %336 = vmatpush1.msra.mxu0 0.0
  %337 = vmatprep.mubr.f32.mxu0 0.0
  %338 = vmatmul.mubr.f32.gmra.mrb[0].mxu0 %v82
  %v339 = vpop.f32.mrb[0].mxu0
  %v340 = vadd.f32 0.0, %v339
  %v341 = vpop.f32.mrb[0].mxu0
  %342 = vmatprep.mubr.f32.mxu0 0.0
  %343 = vmatmul.mubr.f32.gmra.mrb[0].mxu0 %v85
  %v344 = vpop.f32.mrb[0].mxu0
  %v345 = vadd.f32 0.0, %v344
  %v346 = vpop.f32.mrb[0].mxu0
  %347 = vmatprep.mubr.f32.mxu0 0.0
  %348 = vmatmul.mubr.f32.gmra.mrb[0].mxu0 %v88
  %v349 = vpop.f32.mrb[0].mxu0
  %v350 = vadd.f32 0.0, %v349
  %v351 = vpop.f32.mrb[0].mxu0
  %352 = vmatprep.mubr.f32.mxu0 0.0
  %353 = vmatmul.mubr.f32.gmra.mrb[0].mxu0 %v91
  %v354 = vpop.f32.mrb[0].mxu0
  %v355 = vadd.f32 0.0, %v354
  %v356 = vpop.f32.mrb[0].mxu0
  %357 = vmatprep.mubr.f32.mxu0 0.0
  %358 = vmatmul.mubr.f32.gmra.mrb[0].mxu0 %v94
  %v359 = vpop.f32.mrb[0].mxu0
  %v360 = vadd.f32 0.0, %v359
  %v361 = vpop.f32.mrb[0].mxu0
  %362 = vmatprep.mubr.f32.mxu0 0.0
  %363 = vmatmul.mubr.f32.gmra.mrb[0].mxu0 %v97
  %v364 = vpop.f32.mrb[0].mxu0
  %v365 = vadd.f32 0.0, %v364
  %v366 = vpop.f32.mrb[0].mxu0
  %367 = vmatprep.mubr.f32.mxu0 0.0
  %368 = vmatmul.mubr.f32.gmra.mrb[0].mxu0 %v100
  %v369 = vpop.f32.mrb[0].mxu0
  %v370 = vadd.f32 0.0, %v369
  %v371 = vpop.f32.mrb[0].mxu0
  %372 = vmatprep.mubr.f32.mxu0 0.0
  %373 = vmatmul.mubr.f32.gmra.mrb[0].mxu0 %v103
  %v374 = vpop.f32.mrb[0].mxu0
  %v375 = vadd.f32 0.0, %v374
  %v376 = vpop.f32.mrb[0].mxu0
  %377 = vmatprep.mubr.f32.mxu0 0.0
  %378 = vmatmul.mubr.f32.gmra.mrb[0].mxu0 %v106
  %v379 = vpop.f32.mrb[0].mxu0
  %v380 = vadd.f32 0.0, %v379
  %v381 = vpop.f32.mrb[0].mxu0
  %382 = vmatprep.mubr.f32.mxu0 0.0
  %383 = vmatmul.mubr.f32.gmra.mrb[0].mxu0 %v109
  %v384 = vpop.f32.mrb[0].mxu0
  %v385 = vadd.f32 0.0, %v384
  %v386 = vpop.f32.mrb[0].mxu0
  %387 = vmatprep.mubr.f32.mxu0 0.0
  %388 = vmatmul.mubr.f32.gmra.mrb[0].mxu0 %v112
  %v389 = vpop.f32.mrb[0].mxu0
  %v390 = vadd.f32 0.0, %v389
  %v391 = vpop.f32.mrb[0].mxu0
  %392 = vmatprep.mubr.f32.mxu0 0.0
  %393 = vmatmul.mubr.f32.gmra.mrb[0].mxu0 %v115
  %v394 = vpop.f32.mrb[0].mxu0
  %v395 = vadd.f32 0.0, %v394
  %v396 = vpop.f32.mrb[0].mxu0
  %397 = vmatprep.mubr.f32.mxu0 0.0
  %398 = vmatmul.mubr.f32.gmra.mrb[0].mxu0 %v118
  %v399 = vpop.f32.mrb[0].mxu0
  %v400 = vadd.f32 0.0, %v399
  %v401 = vpop.f32.mrb[0].mxu0
  %402 = vmatprep.mubr.f32.mxu0 0.0
  %403 = vmatmul.mubr.f32.gmra.mrb[0].mxu0 %v121
  %v404 = vpop.f32.mrb[0].mxu0
  %v405 = vadd.f32 0.0, %v404
  %v406 = vpop.f32.mrb[0].mxu0
  %407 = vmatprep.mubr.f32.mxu0 0.0
  %408 = vmatmul.mubr.f32.gmra.mrb[0].mxu0 %v124
  %v409 = vpop.f32.mrb[0].mxu0
  %v410 = vadd.f32 0.0, %v409
  %v411 = vpop.f32.mrb[0].mxu0
  %412 = vmatprep.mubr.f32.mxu0 0.0
  %413 = vmatmul.mubr.f32.gmra.mrb[0].mxu0 %v127
  %v414 = vpop.f32.mrb[0].mxu0
  %v415 = vadd.f32 0.0, %v414
  %v416 = vpop.f32.mrb[0].mxu0
  %417 = vmatprep.mubr.f32.mxu0 0.0
  %418 = vmatmul.mubr.f32.gmra.mrb[0].mxu0 %v130
  %v419 = vpop.f32.mrb[0].mxu0
  %v420 = vadd.f32 0.0, %v419
  %v421 = vpop.f32.mrb[0].mxu0
  %422 = vmatprep.mubr.f32.mxu0 0.0
  %423 = vmatmul.mubr.f32.gmra.mrb[0].mxu0 %v133
  %v424 = vpop.f32.mrb[0].mxu0
  %v425 = vadd.f32 0.0, %v424
  %v426 = vpop.f32.mrb[0].mxu0
  %427 = vmatprep.mubr.f32.mxu0 0.0
  %428 = vmatmul.mubr.f32.gmra.mrb[0].mxu0 %v136
  %v429 = vpop.f32.mrb[0].mxu0
  %v430 = vadd.f32 0.0, %v429
  %v431 = vpop.f32.mrb[0].mxu0
  %432 = vmatprep.mubr.f32.mxu0 0.0
  %433 = vmatmul.mubr.f32.gmra.mrb[0].mxu0 %v139
  %v434 = vpop.f32.mrb[0].mxu0
  %v435 = vadd.f32 0.0, %v434
  %v436 = vpop.f32.mrb[0].mxu0
  %437 = vmatprep.mubr.f32.mxu0 0.0
  %438 = vmatmul.mubr.f32.gmra.mrb[0].mxu0 %v142
  %v439 = vpop.f32.mrb[0].mxu0
  %v440 = vadd.f32 0.0, %v439
  %v441 = vpop.f32.mrb[0].mxu0
  %442 = vmatprep.mubr.f32.mxu0 0.0
  %443 = vmatmul.mubr.f32.gmra.mrb[0].mxu0 %v145
  %v444 = vpop.f32.mrb[0].mxu0
  %v445 = vadd.f32 0.0, %v444
  %v446 = vpop.f32.mrb[0].mxu0
  %447 = vmatprep.mubr.f32.mxu0 0.0
  %448 = vmatmul.mubr.f32.gmra.mrb[0].mxu0 %v148
  %v449 = vpop.f32.mrb[0].mxu0
  %v450 = vadd.f32 0.0, %v449
  %v451 = vpop.f32.mrb[0].mxu0
  %452 = vmatprep.mubr.f32.mxu0 0.0
  %453 = vmatmul.mubr.f32.gmra.mrb[0].mxu0 %v151
  %v454 = vpop.f32.mrb[0].mxu0
  %v455 = vadd.f32 0.0, %v454
  %v456 = vpop.f32.mrb[0].mxu0
  %457 = vmatprep.mubr.f32.mxu0 0.0
  %458 = vmatmul.mubr.f32.gmra.mrb[0].mxu0 %v154
  %v459 = vpop.f32.mrb[0].mxu0
  %v460 = vadd.f32 0.0, %v459
  %v461 = vpop.f32.mrb[0].mxu0
  %462 = vmatprep.mubr.f32.mxu0 0.0
  %463 = vmatmul.mubr.f32.gmra.mrb[0].mxu0 %v157
  %v464 = vpop.f32.mrb[0].mxu0
  %v465 = vadd.f32 0.0, %v464
  %v466 = vpop.f32.mrb[0].mxu0
  %467 = vmatprep.mubr.f32.mxu0 0.0
  %468 = vmatmul.mubr.f32.gmra.mrb[0].mxu0 %v160
  %v469 = vpop.f32.mrb[0].mxu0
  %v470 = vadd.f32 0.0, %v469
  %v471 = vpop.f32.mrb[0].mxu0
  %472 = vmatprep.mubr.f32.mxu0 0.0
  %473 = vmatmul.mubr.f32.gmra.mrb[0].mxu0 %v163
  %v474 = vpop.f32.mrb[0].mxu0
  %v475 = vadd.f32 0.0, %v474
  %v476 = vpop.f32.mrb[0].mxu0
  %477 = vmatprep.mubr.f32.mxu0 0.0
  %478 = vmatmul.mubr.f32.gmra.mrb[0].mxu0 %v166
  %v479 = vpop.f32.mrb[0].mxu0
  %v480 = vadd.f32 0.0, %v479
  %v481 = vpop.f32.mrb[0].mxu0
  %482 = vmatprep.mubr.f32.mxu0 0.0
  %483 = vmatmul.mubr.f32.gmra.mrb[0].mxu0 %v169
  %v484 = vpop.f32.mrb[0].mxu0
  %v485 = vadd.f32 0.0, %v484
  %v486 = vpop.f32.mrb[0].mxu0
  %487 = vmatprep.mubr.f32.mxu0 0.0
  %488 = vmatmul.mubr.f32.gmra.mrb[0].mxu0 %v172
  %v489 = vpop.f32.mrb[0].mxu0
  %v490 = vadd.f32 0.0, %v489
  %v491 = vpop.f32.mrb[0].mxu0
  %492 = vmatprep.mubr.f32.mxu0 0.0
  %493 = vmatmul.mubr.f32.gmra.mrb[0].mxu0 %v175
  %v494 = vpop.f32.mrb[0].mxu0
  %v495 = vadd.f32 0.0, %v494
  %v496 = vpop.f32.mrb[0].mxu0
  %497 = vmatprep.mubr.f32.mxu0 0.0
  %498 = vmatmul.mubr.f32.gmra.mrb[0].mxu0 %v178
  %v499 = vpop.f32.mrb[0].mxu0
  %v500 = vadd.f32 0.0, %v499
  %v501 = vpop.f32.mrb[0].mxu0
  %502 = vmatprep.mubr.f32.mxu0 0.0
  %503 = vmatmul.mubr.f32.gmra.mrb[0].mxu0 %v181
  %v504 = vpop.f32.mrb[0].mxu0
  %v505 = vadd.f32 0.0, %v504
  %v506 = vpop.f32.mrb[0].mxu0
  %507 = vmatprep.mubr.f32.mxu0 0.0
  %508 = vmatmul.mubr.f32.gmra.mrb[0].mxu0 %v184
  %v509 = vpop.f32.mrb[0].mxu0
  %v510 = vadd.f32 0.0, %v509
  %v511 = vpop.f32.mrb[0].mxu0
  %512 = vmatprep.mubr.f32.mxu0 0.0
  %513 = vmatmul.mubr.f32.gmra.mrb[0].mxu0 %v187
  %v514 = vpop.f32.mrb[0].mxu0
  %v515 = vadd.f32 0.0, %v514
  %v516 = vpop.f32.mrb[0].mxu0
  %517 = vmatprep.mubr.f32.mxu0 0.0
  %518 = vmatmul.mubr.f32.gmra.mrb[0].mxu0 %v190
  %v519 = vpop.f32.mrb[0].mxu0
  %v520 = vadd.f32 0.0, %v519
  %v521 = vpop.f32.mrb[0].mxu0
  %522 = vmatprep.mubr.f32.mxu0 0.0
  %523 = vmatmul.mubr.f32.gmra.mrb[0].mxu0 %v193
  %v524 = vpop.f32.mrb[0].mxu0
  %v525 = vadd.f32 0.0, %v524
  %v526 = vpop.f32.mrb[0].mxu0
  %527 = vmatprep.mubr.f32.mxu0 0.0
  %528 = vmatmul.mubr.f32.gmra.mrb[0].mxu0 %v196
  %v529 = vpop.f32.mrb[0].mxu0
  %v530 = vadd.f32 0.0, %v529
  %v531 = vpop.f32.mrb[0].mxu0
  %532 = vmatprep.mubr.f32.mxu0 0.0
  %533 = vmatmul.mubr.f32.gmra.mrb[0].mxu0 %v199
  %v534 = vpop.f32.mrb[0].mxu0
  %v535 = vadd.f32 0.0, %v534
  %v536 = vpop.f32.mrb[0].mxu0
  %537 = vmatprep.mubr.f32.mxu0 0.0
  %538 = vmatmul.mubr.f32.gmra.mrb[0].mxu0 %v202
  %v539 = vpop.f32.mrb[0].mxu0
  %v540 = vadd.f32 0.0, %v539
  %v541 = vpop.f32.mrb[0].mxu0
  %542 = vmatprep.mubr.f32.mxu0 0.0
  %543 = vmatmul.mubr.f32.gmra.mrb[0].mxu0 %v205
  %v544 = vpop.f32.mrb[0].mxu0
  %v545 = vadd.f32 0.0, %v544
  %v546 = vpop.f32.mrb[0].mxu0
  %547 = vmatprep.mubr.f32.mxu0 0.0
  %548 = vmatmul.mubr.f32.gmra.mrb[0].mxu0 %v208
  %v549 = vpop.f32.mrb[0].mxu0
  %v550 = vadd.f32 0.0, %v549
  %v551 = vpop.f32.mrb[0].mxu0
  %552 = vmatprep.mubr.f32.mxu0 0.0
  %553 = vmatmul.mubr.f32.gmra.mrb[0].mxu0 %v211
  %v554 = vpop.f32.mrb[0].mxu0
  %v555 = vadd.f32 0.0, %v554
  %v556 = vpop.f32.mrb[0].mxu0
  %557 = vmatprep.mubr.f32.mxu0 0.0
  %558 = vmatmul.mubr.f32.gmra.mrb[0].mxu0 %v214
  %v559 = vpop.f32.mrb[0].mxu0
  %v560 = vadd.f32 0.0, %v559
  %v561 = vpop.f32.mrb[0].mxu0
  %562 = vmatprep.mubr.f32.mxu0 0.0
  %563 = vmatmul.mubr.f32.gmra.mrb[0].mxu0 %v217
  %v564 = vpop.f32.mrb[0].mxu0
  %v565 = vadd.f32 0.0, %v564
  %v566 = vpop.f32.mrb[0].mxu0
  %567 = vmatprep.mubr.f32.mxu0 0.0
  %568 = vmatmul.mubr.f32.gmra.mrb[0].mxu0 %v220
  %v569 = vpop.f32.mrb[0].mxu0
  %v570 = vadd.f32 0.0, %v569
  %v571 = vpop.f32.mrb[0].mxu0
  %572 = vmatprep.mubr.f32.mxu0 0.0
  %573 = vmatmul.mubr.f32.gmra.mrb[0].mxu0 %v223
  %v574 = vpop.f32.mrb[0].mxu0
  %v575 = vadd.f32 0.0, %v574
  %v576 = vpop.f32.mrb[0].mxu0
  %577 = vmatprep.mubr.f32.mxu0 0.0
  %578 = vmatmul.mubr.f32.gmra.mrb[0].mxu0 %v226
  %v579 = vpop.f32.mrb[0].mxu0
  %v580 = vadd.f32 0.0, %v579
  %v581 = vpop.f32.mrb[0].mxu0
  %582 = vmatprep.mubr.f32.mxu0 0.0
  %583 = vmatmul.mubr.f32.gmra.mrb[0].mxu0 %v229
  %v584 = vpop.f32.mrb[0].mxu0
  %v585 = vadd.f32 0.0, %v584
  %v586 = vpop.f32.mrb[0].mxu0
  %587 = vmatprep.mubr.f32.mxu0 0.0
  %588 = vmatmul.mubr.f32.gmra.mrb[0].mxu0 %v232
  %v589 = vpop.f32.mrb[0].mxu0
  %v590 = vadd.f32 0.0, %v589
  %v591 = vpop.f32.mrb[0].mxu0
  %592 = vmatprep.mubr.f32.mxu0 0.0
  %593 = vmatmul.mubr.f32.gmra.mrb[0].mxu0 %v235
  %v594 = vpop.f32.mrb[0].mxu0
  %v595 = vadd.f32 0.0, %v594
  %v596 = vpop.f32.mrb[0].mxu0
  %597 = vmatprep.mubr.f32.mxu0 0.0
  %598 = vmatmul.mubr.f32.gmra.mrb[0].mxu0 %v238
  %v599 = vpop.f32.mrb[0].mxu0
  %v600 = vadd.f32 0.0, %v599
  %v601 = vpop.f32.mrb[0].mxu0
  %602 = vmatprep.mubr.f32.mxu0 0.0
  %603 = vmatmul.mubr.f32.gmra.mrb[0].mxu0 %v241
  %v604 = vpop.f32.mrb[0].mxu0
  %v605 = vadd.f32 0.0, %v604
  %v606 = vpop.f32.mrb[0].mxu0
  %607 = vmatprep.mubr.f32.mxu0 0.0
  %608 = vmatmul.mubr.f32.gmra.mrb[0].mxu0 %v244
  %v609 = vpop.f32.mrb[0].mxu0
  %v610 = vadd.f32 0.0, %v609
  %v611 = vpop.f32.mrb[0].mxu0
  %612 = vmatprep.mubr.f32.mxu0 0.0
  %613 = vmatmul.mubr.f32.gmra.mrb[0].mxu0 %v247
  %v614 = vpop.f32.mrb[0].mxu0
  %v615 = vadd.f32 0.0, %v614
  %v616 = vpop.f32.mrb[0].mxu0
  %617 = vmatprep.mubr.f32.mxu0 0.0
  %618 = vmatmul.mubr.f32.gmra.mrb[0].mxu0 %v250
  %v619 = vpop.f32.mrb[0].mxu0
  %v620 = vadd.f32 0.0, %v619
  %v621 = vpop.f32.mrb[0].mxu0
  %622 = vmatprep.mubr.f32.mxu0 0.0
  %623 = vmatmul.mubr.f32.gmra.mrb[0].mxu0 %v253
  %v624 = vpop.f32.mrb[0].mxu0
  %v625 = vadd.f32 0.0, %v624
  %v626 = vpop.f32.mrb[0].mxu0
  %627 = vmatprep.mubr.f32.mxu0 0.0
  %628 = vmatmul.mubr.f32.gmra.mrb[0].mxu0 %v256
  %v629 = vpop.f32.mrb[0].mxu0
  %v630 = vadd.f32 0.0, %v629
  %v631 = vpop.f32.mrb[0].mxu0
  %632 = vmatprep.mubr.f32.mxu0 0.0
  %633 = vmatmul.mubr.f32.gmra.mrb[0].mxu0 %v259
  %v634 = vpop.f32.mrb[0].mxu0
  %v635 = vadd.f32 0.0, %v634
  %v636 = vpop.f32.mrb[0].mxu0
  %637 = vmatprep.mubr.f32.mxu0 0.0
  %638 = vmatmul.mubr.f32.gmra.mrb[0].mxu0 %v262
  %v639 = vpop.f32.mrb[0].mxu0
  %v640 = vadd.f32 0.0, %v639
  %v641 = vpop.f32.mrb[0].mxu0
  %642 = vmatprep.mubr.f32.mxu0 0.0
  %643 = vmatmul.mubr.f32.gmra.mrb[0].mxu0 %v265
  %v644 = vpop.f32.mrb[0].mxu0
  %v645 = vadd.f32 0.0, %v644
  %v646 = vpop.f32.mrb[0].mxu0
  %647 = vmatprep.mubr.f32.mxu0 0.0
  %648 = vmatmul.mubr.f32.gmra.mrb[0].mxu0 %v268
  %v649 = vpop.f32.mrb[0].mxu0
  %v650 = vadd.f32 0.0, %v649
  %v651 = vpop.f32.mrb[0].mxu0
  %652 = vmatprep.mubr.f32.mxu0 0.0
  %653 = vmatmul.mubr.f32.gmra.mrb[0].mxu0 %v271
  %v654 = vpop.f32.mrb[0].mxu0
  %v655 = vadd.f32 0.0, %v654
  %v656 = vpop.f32.mrb[0].mxu0
  %657 = vdwg.mxu0
  %658 = vst [vmem:[%s2] sm:$0xff] %v340
  %659 = vst [vmem:[%s2 + $0x8] sm:$0xff] %v345
  %660 = vst [vmem:[%s2 + $0x10] sm:$0xff] %v350
  %661 = vst [vmem:[%s2 + $0x18] sm:$0xff] %v355
  %662 = vst [vmem:[%s2 + $0x20] sm:$0xff] %v360
  %663 = vst [vmem:[%s2 + $0x28] sm:$0xff] %v365
  %664 = vst [vmem:[%s2 + $0x30] sm:$0xff] %v370
  %665 = vst [vmem:[%s2 + $0x38] sm:$0xff] %v375
  %666 = vst [vmem:[%s2 + $0x40] sm:$0xff] %v380
  %667 = vst [vmem:[%s2 + $0x48] sm:$0xff] %v385
  %668 = vst [vmem:[%s2 + $0x50] sm:$0xff] %v390
  %669 = vst [vmem:[%s2 + $0x58] sm:$0xff] %v395
  %670 = vst [vmem:[%s2 + $0x60] sm:$0xff] %v400
  %671 = vst [vmem:[%s2 + $0x68] sm:$0xff] %v405
  %672 = vst [vmem:[%s2 + $0x70] sm:$0xff] %v410
  %673 = vst [vmem:[%s2 + $0x78] sm:$0xff] %v415
  %674 = vst [vmem:[%s2 + $0x80] sm:$0xff] %v420
  %675 = vst [vmem:[%s2 + $0x88] sm:$0xff] %v425
  %676 = vst [vmem:[%s2 + $0x90] sm:$0xff] %v430
  %677 = vst [vmem:[%s2 + $0x98] sm:$0xff] %v435
  %678 = vst [vmem:[%s2 + $0xa0] sm:$0xff] %v440
  %679 = vst [vmem:[%s2 + $0xa8] sm:$0xff] %v445
  %680 = vst [vmem:[%s2 + $0xb0] sm:$0xff] %v450
  %681 = vst [vmem:[%s2 + $0xb8] sm:$0xff] %v455
  %682 = vst [vmem:[%s2 + $0xc0] sm:$0xff] %v460
  %683 = vst [vmem:[%s2 + $0xc8] sm:$0xff] %v465
  %684 = vst [vmem:[%s2 + $0xd0] sm:$0xff] %v470
  %685 = vst [vmem:[%s2 + $0xd8] sm:$0xff] %v475
  %686 = vst [vmem:[%s2 + $0xe0] sm:$0xff] %v480
  %687 = vst [vmem:[%s2 + $0xe8] sm:$0xff] %v485
  %688 = vst [vmem:[%s2 + $0xf0] sm:$0xff] %v490
  %689 = vst [vmem:[%s2 + $0xf8] sm:$0xff] %v495
  %690 = vst [vmem:[%s2 + $0x100] sm:$0xff] %v500
  %691 = vst [vmem:[%s2 + $0x108] sm:$0xff] %v505
  %692 = vst [vmem:[%s2 + $0x110] sm:$0xff] %v510
  %693 = vst [vmem:[%s2 + $0x118] sm:$0xff] %v515
  %694 = vst [vmem:[%s2 + $0x120] sm:$0xff] %v520
  %695 = vst [vmem:[%s2 + $0x128] sm:$0xff] %v525
  %696 = vst [vmem:[%s2 + $0x130] sm:$0xff] %v530
  %697 = vst [vmem:[%s2 + $0x138] sm:$0xff] %v535
  %698 = vst [vmem:[%s2 + $0x140] sm:$0xff] %v540
  %699 = vst [vmem:[%s2 + $0x148] sm:$0xff] %v545
  %700 = vst [vmem:[%s2 + $0x150] sm:$0xff] %v550
  %701 = vst [vmem:[%s2 + $0x158] sm:$0xff] %v555
  %702 = vst [vmem:[%s2 + $0x160] sm:$0xff] %v560
  %703 = vst [vmem:[%s2 + $0x168] sm:$0xff] %v565
  %704 = vst [vmem:[%s2 + $0x170] sm:$0xff] %v570
  %705 = vst [vmem:[%s2 + $0x178] sm:$0xff] %v575
  %706 = vst [vmem:[%s2 + $0x180] sm:$0xff] %v580
  %707 = vst [vmem:[%s2 + $0x188] sm:$0xff] %v585
  %708 = vst [vmem:[%s2 + $0x190] sm:$0xff] %v590
  %709 = vst [vmem:[%s2 + $0x198] sm:$0xff] %v595
  %710 = vst [vmem:[%s2 + $0x1a0] sm:$0xff] %v600
  %711 = vst [vmem:[%s2 + $0x1a8] sm:$0xff] %v605
  %712 = vst [vmem:[%s2 + $0x1b0] sm:$0xff] %v610
  %713 = vst [vmem:[%s2 + $0x1b8] sm:$0xff] %v615
  %714 = vst [vmem:[%s2 + $0x1c0] sm:$0xff] %v620
  %715 = vst [vmem:[%s2 + $0x1c8] sm:$0xff] %v625
  %716 = vst [vmem:[%s2 + $0x1d0] sm:$0xff] %v630
  %717 = vst [vmem:[%s2 + $0x1d8] sm:$0xff] %v635
  %718 = vst [vmem:[%s2 + $0x1e0] sm:$0xff] %v640
  %719 = vst [vmem:[%s2 + $0x1e8] sm:$0xff] %v645
  %720 = vst [vmem:[%s2 + $0x1f0] sm:$0xff] %v650
  %721 = vst [vmem:[%s2 + $0x1f8] sm:$0xff] %v655
  %v722 = vadd.f32 %v340, %v345
  %v723 = vadd.f32 %v722, %v350
  %v724 = vadd.f32 %v723, %v355
  %v725 = vadd.f32 %v724, %v360
  %v726 = vadd.f32 %v725, %v365
  %v727 = vadd.f32 %v726, %v370
  %v728 = vadd.f32 %v727, %v375
  %v729 = vadd.f32 %v728, %v380
  %v730 = vadd.f32 %v729, %v385
  %v731 = vadd.f32 %v730, %v390
  %v732 = vadd.f32 %v731, %v395
  %v733 = vadd.f32 %v732, %v400
  %v734 = vadd.f32 %v733, %v405
  %v735 = vadd.f32 %v734, %v410
  %v736 = vadd.f32 %v735, %v415
  %v737 = vadd.f32 %v736, %v420
  %v738 = vadd.f32 %v737, %v425
  %v739 = vadd.f32 %v738, %v430
  %v740 = vadd.f32 %v739, %v435
  %v741 = vadd.f32 %v740, %v440
  %v742 = vadd.f32 %v741, %v445
  %v743 = vadd.f32 %v742, %v450
  %v744 = vadd.f32 %v743, %v455
  %v745 = vadd.f32 %v744, %v460
  %v746 = vadd.f32 %v745, %v465
  %v747 = vadd.f32 %v746, %v470
  %v748 = vadd.f32 %v747, %v475
  %v749 = vadd.f32 %v748, %v480
  %v750 = vadd.f32 %v749, %v485
  %v751 = vadd.f32 %v750, %v490
  %v752 = vadd.f32 %v751, %v495
  %v753 = vadd.f32 %v752, %v500
  %v754 = vadd.f32 %v753, %v505
  %v755 = vadd.f32 %v754, %v510
  %v756 = vadd.f32 %v755, %v515
  %v757 = vadd.f32 %v756, %v520
  %v758 = vadd.f32 %v757, %v525
  %v759 = vadd.f32 %v758, %v530
  %v760 = vadd.f32 %v759, %v535
  %v761 = vadd.f32 %v760, %v540
  %v762 = vadd.f32 %v761, %v545
  %v763 = vadd.f32 %v762, %v550
  %v764 = vadd.f32 %v763, %v555
  %v765 = vadd.f32 %v764, %v560
  %v766 = vadd.f32 %v765, %v565
  %v767 = vadd.f32 %v766, %v570
  %v768 = vadd.f32 %v767, %v575
  %v769 = vadd.f32 %v768, %v580
  %v770 = vadd.f32 %v769, %v585
  %v771 = vadd.f32 %v770, %v590
  %v772 = vadd.f32 %v771, %v595
  %v773 = vadd.f32 %v772, %v600
  %v774 = vadd.f32 %v773, %v605
  %v775 = vadd.f32 %v774, %v610
  %v776 = vadd.f32 %v775, %v615
  %v777 = vadd.f32 %v776, %v620
  %v778 = vadd.f32 %v777, %v625
  %v779 = vadd.f32 %v778, %v630
  %v780 = vadd.f32 %v779, %v635
  %v781 = vadd.f32 %v780, %v640
  %v782 = vadd.f32 %v781, %v645
  %v783 = vadd.f32 %v782, %v650
  %v784 = vadd.f32 %v783, %v655
  %785 = vst [vmem:[%s3] sm:$0xff] %v784
  %v786 = vmul.f32 %v340, %v340
  %v787 = vmul.f32 %v345, %v345
  %v788 = vmul.f32 %v350, %v350
  %v789 = vmul.f32 %v355, %v355
  %v790 = vmul.f32 %v360, %v360
  %v791 = vmul.f32 %v365, %v365
  %v792 = vmul.f32 %v370, %v370
  %v793 = vmul.f32 %v375, %v375
  %v794 = vmul.f32 %v380, %v380
  %v795 = vmul.f32 %v385, %v385
  %v796 = vmul.f32 %v390, %v390
  %v797 = vmul.f32 %v395, %v395
  %v798 = vmul.f32 %v400, %v400
  %v799 = vmul.f32 %v405, %v405
  %v800 = vmul.f32 %v410, %v410
  %v801 = vmul.f32 %v415, %v415
  %v802 = vmul.f32 %v420, %v420
  %v803 = vmul.f32 %v425, %v425
  %v804 = vmul.f32 %v430, %v430
  %v805 = vmul.f32 %v435, %v435
  %v806 = vmul.f32 %v440, %v440
  %v807 = vmul.f32 %v445, %v445
  %v808 = vmul.f32 %v450, %v450
  %v809 = vmul.f32 %v455, %v455
  %v810 = vmul.f32 %v460, %v460
  %v811 = vmul.f32 %v465, %v465
  %v812 = vmul.f32 %v470, %v470
  %v813 = vmul.f32 %v475, %v475
  %v814 = vmul.f32 %v480, %v480
  %v815 = vmul.f32 %v485, %v485
  %v816 = vmul.f32 %v490, %v490
  %v817 = vmul.f32 %v495, %v495
  %v818 = vmul.f32 %v500, %v500
  %v819 = vmul.f32 %v505, %v505
  %v820 = vmul.f32 %v510, %v510
  %v821 = vmul.f32 %v515, %v515
  %v822 = vmul.f32 %v520, %v520
  %v823 = vmul.f32 %v525, %v525
  %v824 = vmul.f32 %v530, %v530
  %v825 = vmul.f32 %v535, %v535
  %v826 = vmul.f32 %v540, %v540
  %v827 = vmul.f32 %v545, %v545
  %v828 = vmul.f32 %v550, %v550
  %v829 = vmul.f32 %v555, %v555
  %v830 = vmul.f32 %v560, %v560
  %v831 = vmul.f32 %v565, %v565
  %v832 = vmul.f32 %v570, %v570
  %v833 = vmul.f32 %v575, %v575
  %v834 = vmul.f32 %v580, %v580
  %v835 = vmul.f32 %v585, %v585
  %v836 = vmul.f32 %v590, %v590
  %v837 = vmul.f32 %v595, %v595
  %v838 = vmul.f32 %v600, %v600
  %v839 = vmul.f32 %v605, %v605
  %v840 = vmul.f32 %v610, %v610
  %v841 = vmul.f32 %v615, %v615
  %v842 = vmul.f32 %v620, %v620
  %v843 = vmul.f32 %v625, %v625
  %v844 = vmul.f32 %v630, %v630
  %v845 = vmul.f32 %v635, %v635
  %v846 = vmul.f32 %v640, %v640
  %v847 = vmul.f32 %v645, %v645
  %v848 = vmul.f32 %v650, %v650
  %v849 = vmul.f32 %v655, %v655
  %v850 = vadd.f32 %v786, %v787
  %v851 = vadd.f32 %v850, %v788
  %v852 = vadd.f32 %v851, %v789
  %v853 = vadd.f32 %v852, %v790
  %v854 = vadd.f32 %v853, %v791
  %v855 = vadd.f32 %v854, %v792
  %v856 = vadd.f32 %v855, %v793
  %v857 = vadd.f32 %v856, %v794
  %v858 = vadd.f32 %v857, %v795
  %v859 = vadd.f32 %v858, %v796
  %v860 = vadd.f32 %v859, %v797
  %v861 = vadd.f32 %v860, %v798
  %v862 = vadd.f32 %v861, %v799
  %v863 = vadd.f32 %v862, %v800
  %v864 = vadd.f32 %v863, %v801
  %v865 = vadd.f32 %v864, %v802
  %v866 = vadd.f32 %v865, %v803
  %v867 = vadd.f32 %v866, %v804
  %v868 = vadd.f32 %v867, %v805
  %v869 = vadd.f32 %v868, %v806
  %v870 = vadd.f32 %v869, %v807
  %v871 = vadd.f32 %v870, %v808
  %v872 = vadd.f32 %v871, %v809
  %v873 = vadd.f32 %v872, %v810
  %v874 = vadd.f32 %v873, %v811
  %v875 = vadd.f32 %v874, %v812
  %v876 = vadd.f32 %v875, %v813
  %v877 = vadd.f32 %v876, %v814
  %v878 = vadd.f32 %v877, %v815
  %v879 = vadd.f32 %v878, %v816
  %v880 = vadd.f32 %v879, %v817
  %v881 = vadd.f32 %v880, %v818
  %v882 = vadd.f32 %v881, %v819
  %v883 = vadd.f32 %v882, %v820
  %v884 = vadd.f32 %v883, %v821
  %v885 = vadd.f32 %v884, %v822
  %v886 = vadd.f32 %v885, %v823
  %v887 = vadd.f32 %v886, %v824
  %v888 = vadd.f32 %v887, %v825
  %v889 = vadd.f32 %v888, %v826
  %v890 = vadd.f32 %v889, %v827
  %v891 = vadd.f32 %v890, %v828
  %v892 = vadd.f32 %v891, %v829
  %v893 = vadd.f32 %v892, %v830
  %v894 = vadd.f32 %v893, %v831
  %v895 = vadd.f32 %v894, %v832
  %v896 = vadd.f32 %v895, %v833
  %v897 = vadd.f32 %v896, %v834
  %v898 = vadd.f32 %v897, %v835
  %v899 = vadd.f32 %v898, %v836
  %v900 = vadd.f32 %v899, %v837
  %v901 = vadd.f32 %v900, %v838
  %v902 = vadd.f32 %v901, %v839
  %v903 = vadd.f32 %v902, %v840
  %v904 = vadd.f32 %v903, %v841
  %v905 = vadd.f32 %v904, %v842
  %v906 = vadd.f32 %v905, %v843
  %v907 = vadd.f32 %v906, %v844
  %v908 = vadd.f32 %v907, %v845
  %v909 = vadd.f32 %v908, %v846
  %v910 = vadd.f32 %v909, %v847
  %v911 = vadd.f32 %v910, %v848
  %v912 = vadd.f32 %v911, %v849
  %913 = vst [vmem:[%s4] sm:$0xff] %v912
  // Predicated region
  $region10: #{conv_t_block.2} parent=0 // pred_check
    _
  $region11: #{conv_t_block.2} parent=0 // pred_check_branch
    %915 = sbr.rel (0) target = $region13
  $region12: #{conv_t_block.2} parent=0 // pred_region
    _
  $region13: #{conv_t_block.2} parent=0 // pred_fallthru
    _
  // Predicated region
  $region14: #{conv_t_block.2} parent=0 // pred_check
    _
  $region15: #{conv_t_block.2} parent=0 // pred_check_branch
    %917 = sbr.rel (0) target = $region17
  $region16: #{conv_t_block.2} parent=0 // pred_region
    _
  $region17: #{conv_t_block.2} parent=0 // pred_fallthru
    _
  // Predicated region
  $region18: #{conv_t_block.2} parent=0 // pred_check
    _
  $region19: #{conv_t_block.2} parent=0 // pred_check_branch
    %919 = sbr.rel (0) target = $region21
  $region20: #{conv_t_block.2} parent=0 // pred_region
    _
  $region21: #{conv_t_block.2} parent=0 // pred_fallthru
    _
  // Predicated region
  $region22: #{conv_t_block.2} parent=0 // pred_check
    _
  $region23: #{conv_t_block.2} parent=0 // pred_check_branch
    %921 = sbr.rel (0) target = $region25
  $region24: #{conv_t_block.2} parent=0 // pred_region
    _
  $region25: #{conv_t_block.2} parent=0 // pred_fallthru
    _
  // Predicated region
  $region26: #{conv_t_block.2} parent=0 // pred_check
    _
  $region27: #{conv_t_block.2} parent=0 // pred_check_branch
    %923 = sbr.rel (0) target = $region29
  $region28: #{conv_t_block.2} parent=0 // pred_region
    _
  $region29: #{conv_t_block.2} parent=0 // pred_fallthru
    _
  // Predicated region
  $region30: #{conv_t_block.2} parent=0 // pred_check
    _
  $region31: #{conv_t_block.2} parent=0 // pred_check_branch
    %925 = sbr.rel (0) target = $region33
  $region32: #{conv_t_block.2} parent=0 // pred_region
    _
  $region33: #{conv_t_block.2} parent=0 // pred_fallthru
    _

// kernel: conv_t_block.3
$region0: #{conv_t_block.3}
  #allocation0 [shape = 'u32[]', space=smem, size = 0x4, offset = 0x4, fixed_abs, tag = 'smem constant byte address 0x4 - core index']
  #allocation1 [shape = 'u32[144,128]{1,0:T(1,128)}', space=vmem, size = 0x12000, scoped, tag = 'internal scratch']
  #allocation2 [shape = 'f32[1,1]{1,0:T(1,128)S(1)}', space=vmem, size = 0x200, scoped, tag = 'scoped memory for conv_t_block.3']
  %s0 = inlined_call_operand.vmem [shape: f32[512,128], index: 0, kind: input, shape index: {}]
  %s1 = inlined_call_operand.vmem [shape: f32[1,128], index: 1, kind: input, shape index: {}]
  %s2 = inlined_call_operand.vmem [shape: f32[1,128], index: 2, kind: input, shape index: {}]
  %s3 = inlined_call_operand.<no memory space> [shape: f32[1,1], index: 3, kind: input, shape index: {}]
  %s4 = inlined_call_operand.vmem [shape: f32[512,128], index: 4, kind: output, shape index: {}]
  %s5 = sld [smem:[#allocation0]]
  $region26: #{conv_t_block.3} parent=0
    _
  %s7 = ssub.s32 1, %s5
  %s8 = scalar_select 0, %s7, %s5
  %v9 = vstv %s3
  %10 = vst [vmem:[#allocation2] sm:$0x1] %v9
  // Predicated region
  $region2: #{conv_t_block.3} parent=0 // pred_check
    _
  $region3: #{conv_t_block.3} parent=0 // pred_check_branch
    %12 = sbr.rel (0) target = $region5
  $region4: #{conv_t_block.3} parent=0 // pred_region
    _
  $region5: #{conv_t_block.3} parent=0 // pred_fallthru
    _
  // Predicated region
  $region6: #{conv_t_block.3} parent=0 // pred_check
    _
  $region7: #{conv_t_block.3} parent=0 // pred_check_branch
    %14 = sbr.rel (0) target = $region9
  $region8: #{conv_t_block.3} parent=0 // pred_region
    _
  $region9: #{conv_t_block.3} parent=0 // pred_fallthru
    _
  // Predicated region
  $region10: #{conv_t_block.3} parent=0 // pred_check
    _
  $region11: #{conv_t_block.3} parent=0 // pred_check_branch
    %16 = sbr.rel (0) target = $region13
  $region12: #{conv_t_block.3} parent=0 // pred_region
    _
  $region13: #{conv_t_block.3} parent=0 // pred_fallthru
    _
  // Predicated region
  $region14: #{conv_t_block.3} parent=0 // pred_check
    _
  $region15: #{conv_t_block.3} parent=0 // pred_check_branch
    %18 = sbr.rel (0) target = $region17
  $region16: #{conv_t_block.3} parent=0 // pred_region
    _
  $region17: #{conv_t_block.3} parent=0 // pred_fallthru
    _
  %v19 = vld [vmem:[%s0] sm:$0xff]
  %v20 = vld [vmem:[%s0 + $0x8] sm:$0xff]
  %v21 = vld [vmem:[%s0 + $0x10] sm:$0xff]
  %v22 = vld [vmem:[%s0 + $0x18] sm:$0xff]
  %v23 = vld [vmem:[%s0 + $0x20] sm:$0xff]
  %v24 = vld [vmem:[%s0 + $0x28] sm:$0xff]
  %v25 = vld [vmem:[%s0 + $0x30] sm:$0xff]
  %v26 = vld [vmem:[%s0 + $0x38] sm:$0xff]
  %v27 = vld [vmem:[%s0 + $0x40] sm:$0xff]
  %v28 = vld [vmem:[%s0 + $0x48] sm:$0xff]
  %v29 = vld [vmem:[%s0 + $0x50] sm:$0xff]
  %v30 = vld [vmem:[%s0 + $0x58] sm:$0xff]
  %v31 = vld [vmem:[%s0 + $0x60] sm:$0xff]
  %v32 = vld [vmem:[%s0 + $0x68] sm:$0xff]
  %v33 = vld [vmem:[%s0 + $0x70] sm:$0xff]
  %v34 = vld [vmem:[%s0 + $0x78] sm:$0xff]
  %v35 = vld [vmem:[%s0 + $0x80] sm:$0xff]
  %v36 = vld [vmem:[%s0 + $0x88] sm:$0xff]
  %v37 = vld [vmem:[%s0 + $0x90] sm:$0xff]
  %v38 = vld [vmem:[%s0 + $0x98] sm:$0xff]
  %v39 = vld [vmem:[%s0 + $0xa0] sm:$0xff]
  %v40 = vld [vmem:[%s0 + $0xa8] sm:$0xff]
  %v41 = vld [vmem:[%s0 + $0xb0] sm:$0xff]
  %v42 = vld [vmem:[%s0 + $0xb8] sm:$0xff]
  %v43 = vld [vmem:[%s0 + $0xc0] sm:$0xff]
  %v44 = vld [vmem:[%s0 + $0xc8] sm:$0xff]
  %v45 = vld [vmem:[%s0 + $0xd0] sm:$0xff]
  %v46 = vld [vmem:[%s0 + $0xd8] sm:$0xff]
  %v47 = vld [vmem:[%s0 + $0xe0] sm:$0xff]
  %v48 = vld [vmem:[%s0 + $0xe8] sm:$0xff]
  %v49 = vld [vmem:[%s0 + $0xf0] sm:$0xff]
  %v50 = vld [vmem:[%s0 + $0xf8] sm:$0xff]
  %v51 = vld [vmem:[%s0 + $0x100] sm:$0xff]
  %v52 = vld [vmem:[%s0 + $0x108] sm:$0xff]
  %v53 = vld [vmem:[%s0 + $0x110] sm:$0xff]
  %v54 = vld [vmem:[%s0 + $0x118] sm:$0xff]
  %v55 = vld [vmem:[%s0 + $0x120] sm:$0xff]
  %v56 = vld [vmem:[%s0 + $0x128] sm:$0xff]
  %v57 = vld [vmem:[%s0 + $0x130] sm:$0xff]
  %v58 = vld [vmem:[%s0 + $0x138] sm:$0xff]
  %v59 = vld [vmem:[%s0 + $0x140] sm:$0xff]
  %v60 = vld [vmem:[%s0 + $0x148] sm:$0xff]
  %v61 = vld [vmem:[%s0 + $0x150] sm:$0xff]
  %v62 = vld [vmem:[%s0 + $0x158] sm:$0xff]
  %v63 = vld [vmem:[%s0 + $0x160] sm:$0xff]
  %v64 = vld [vmem:[%s0 + $0x168] sm:$0xff]
  %v65 = vld [vmem:[%s0 + $0x170] sm:$0xff]
  %v66 = vld [vmem:[%s0 + $0x178] sm:$0xff]
  %v67 = vld [vmem:[%s0 + $0x180] sm:$0xff]
  %v68 = vld [vmem:[%s0 + $0x188] sm:$0xff]
  %v69 = vld [vmem:[%s0 + $0x190] sm:$0xff]
  %v70 = vld [vmem:[%s0 + $0x198] sm:$0xff]
  %v71 = vld [vmem:[%s0 + $0x1a0] sm:$0xff]
  %v72 = vld [vmem:[%s0 + $0x1a8] sm:$0xff]
  %v73 = vld [vmem:[%s0 + $0x1b0] sm:$0xff]
  %v74 = vld [vmem:[%s0 + $0x1b8] sm:$0xff]
  %v75 = vld [vmem:[%s0 + $0x1c0] sm:$0xff]
  %v76 = vld [vmem:[%s0 + $0x1c8] sm:$0xff]
  %v77 = vld [vmem:[%s0 + $0x1d0] sm:$0xff]
  %v78 = vld [vmem:[%s0 + $0x1d8] sm:$0xff]
  %v79 = vld [vmem:[%s0 + $0x1e0] sm:$0xff]
  %v80 = vld [vmem:[%s0 + $0x1e8] sm:$0xff]
  %v81 = vld [vmem:[%s0 + $0x1f0] sm:$0xff]
  %v82 = vld [vmem:[%s0 + $0x1f8] sm:$0xff]
  %v83 = vld [vmem:[%s1] sm:$0x1]
  %v85 = vlaneseq
  %v86 = vshrl.u32 %v85, 7
  %v87 = vsub.s32 0, %v86
  %v88 = vrot.slane %v83, %v87
  %v90 = vmul.f32 %v19, %v88
  %v91 = vmul.f32 %v20, %v88
  %v92 = vmul.f32 %v21, %v88
  %v93 = vmul.f32 %v22, %v88
  %v94 = vmul.f32 %v23, %v88
  %v95 = vmul.f32 %v24, %v88
  %v96 = vmul.f32 %v25, %v88
  %v97 = vmul.f32 %v26, %v88
  %v98 = vmul.f32 %v27, %v88
  %v99 = vmul.f32 %v28, %v88
  %v100 = vmul.f32 %v29, %v88
  %v101 = vmul.f32 %v30, %v88
  %v102 = vmul.f32 %v31, %v88
  %v103 = vmul.f32 %v32, %v88
  %v104 = vmul.f32 %v33, %v88
  %v105 = vmul.f32 %v34, %v88
  %v106 = vmul.f32 %v35, %v88
  %v107 = vmul.f32 %v36, %v88
  %v108 = vmul.f32 %v37, %v88
  %v109 = vmul.f32 %v38, %v88
  %v110 = vmul.f32 %v39, %v88
  %v111 = vmul.f32 %v40, %v88
  %v112 = vmul.f32 %v41, %v88
  %v113 = vmul.f32 %v42, %v88
  %v114 = vmul.f32 %v43, %v88
  %v115 = vmul.f32 %v44, %v88
  %v116 = vmul.f32 %v45, %v88
  %v117 = vmul.f32 %v46, %v88
  %v118 = vmul.f32 %v47, %v88
  %v119 = vmul.f32 %v48, %v88
  %v120 = vmul.f32 %v49, %v88
  %v121 = vmul.f32 %v50, %v88
  %v122 = vmul.f32 %v51, %v88
  %v123 = vmul.f32 %v52, %v88
  %v124 = vmul.f32 %v53, %v88
  %v125 = vmul.f32 %v54, %v88
  %v126 = vmul.f32 %v55, %v88
  %v127 = vmul.f32 %v56, %v88
  %v128 = vmul.f32 %v57, %v88
  %v129 = vmul.f32 %v58, %v88
  %v130 = vmul.f32 %v59, %v88
  %v131 = vmul.f32 %v60, %v88
  %v132 = vmul.f32 %v61, %v88
  %v133 = vmul.f32 %v62, %v88
  %v134 = vmul.f32 %v63, %v88
  %v135 = vmul.f32 %v64, %v88
  %v136 = vmul.f32 %v65, %v88
  %v137 = vmul.f32 %v66, %v88
  %v138 = vmul.f32 %v67, %v88
  %v139 = vmul.f32 %v68, %v88
  %v140 = vmul.f32 %v69, %v88
  %v141 = vmul.f32 %v70, %v88
  %v142 = vmul.f32 %v71, %v88
  %v143 = vmul.f32 %v72, %v88
  %v144 = vmul.f32 %v73, %v88
  %v145 = vmul.f32 %v74, %v88
  %v146 = vmul.f32 %v75, %v88
  %v147 = vmul.f32 %v76, %v88
  %v148 = vmul.f32 %v77, %v88
  %v149 = vmul.f32 %v78, %v88
  %v150 = vmul.f32 %v79, %v88
  %v151 = vmul.f32 %v80, %v88
  %v152 = vmul.f32 %v81, %v88
  %v153 = vmul.f32 %v82, %v88
  %v154 = vld [vmem:[%s2] sm:$0x1]
  %v156 = vlaneseq
  %v157 = vshrl.u32 %v156, 7
  %v158 = vsub.s32 0, %v157
  %v159 = vrot.slane %v154, %v158
  %v161 = vadd.f32 %v90, %v159
  %v162 = vadd.f32 %v91, %v159
  %v163 = vadd.f32 %v92, %v159
  %v164 = vadd.f32 %v93, %v159
  %v165 = vadd.f32 %v94, %v159
  %v166 = vadd.f32 %v95, %v159
  %v167 = vadd.f32 %v96, %v159
  %v168 = vadd.f32 %v97, %v159
  %v169 = vadd.f32 %v98, %v159
  %v170 = vadd.f32 %v99, %v159
  %v171 = vadd.f32 %v100, %v159
  %v172 = vadd.f32 %v101, %v159
  %v173 = vadd.f32 %v102, %v159
  %v174 = vadd.f32 %v103, %v159
  %v175 = vadd.f32 %v104, %v159
  %v176 = vadd.f32 %v105, %v159
  %v177 = vadd.f32 %v106, %v159
  %v178 = vadd.f32 %v107, %v159
  %v179 = vadd.f32 %v108, %v159
  %v180 = vadd.f32 %v109, %v159
  %v181 = vadd.f32 %v110, %v159
  %v182 = vadd.f32 %v111, %v159
  %v183 = vadd.f32 %v112, %v159
  %v184 = vadd.f32 %v113, %v159
  %v185 = vadd.f32 %v114, %v159
  %v186 = vadd.f32 %v115, %v159
  %v187 = vadd.f32 %v116, %v159
  %v188 = vadd.f32 %v117, %v159
  %v189 = vadd.f32 %v118, %v159
  %v190 = vadd.f32 %v119, %v159
  %v191 = vadd.f32 %v120, %v159
  %v192 = vadd.f32 %v121, %v159
  %v193 = vadd.f32 %v122, %v159
  %v194 = vadd.f32 %v123, %v159
  %v195 = vadd.f32 %v124, %v159
  %v196 = vadd.f32 %v125, %v159
  %v197 = vadd.f32 %v126, %v159
  %v198 = vadd.f32 %v127, %v159
  %v199 = vadd.f32 %v128, %v159
  %v200 = vadd.f32 %v129, %v159
  %v201 = vadd.f32 %v130, %v159
  %v202 = vadd.f32 %v131, %v159
  %v203 = vadd.f32 %v132, %v159
  %v204 = vadd.f32 %v133, %v159
  %v205 = vadd.f32 %v134, %v159
  %v206 = vadd.f32 %v135, %v159
  %v207 = vadd.f32 %v136, %v159
  %v208 = vadd.f32 %v137, %v159
  %v209 = vadd.f32 %v138, %v159
  %v210 = vadd.f32 %v139, %v159
  %v211 = vadd.f32 %v140, %v159
  %v212 = vadd.f32 %v141, %v159
  %v213 = vadd.f32 %v142, %v159
  %v214 = vadd.f32 %v143, %v159
  %v215 = vadd.f32 %v144, %v159
  %v216 = vadd.f32 %v145, %v159
  %v217 = vadd.f32 %v146, %v159
  %v218 = vadd.f32 %v147, %v159
  %v219 = vadd.f32 %v148, %v159
  %v220 = vadd.f32 %v149, %v159
  %v221 = vadd.f32 %v150, %v159
  %v222 = vadd.f32 %v151, %v159
  %v223 = vadd.f32 %v152, %v159
  %v224 = vadd.f32 %v153, %v159
  %v225 = vld [vmem:[#allocation2] sm:$0x1]
  %s226 = vtos %v225
  %vm227 = vcmp.ge.f32.partialorder %v161, 0.0
  %vm228 = vcmp.ge.f32.partialorder %v162, 0.0
  %vm229 = vcmp.ge.f32.partialorder %v163, 0.0
  %vm230 = vcmp.ge.f32.partialorder %v164, 0.0
  %vm231 = vcmp.ge.f32.partialorder %v165, 0.0
  %vm232 = vcmp.ge.f32.partialorder %v166, 0.0
  %vm233 = vcmp.ge.f32.partialorder %v167, 0.0
  %vm234 = vcmp.ge.f32.partialorder %v168, 0.0
  %vm235 = vcmp.ge.f32.partialorder %v169, 0.0
  %vm236 = vcmp.ge.f32.partialorder %v170, 0.0
  %vm237 = vcmp.ge.f32.partialorder %v171, 0.0
  %vm238 = vcmp.ge.f32.partialorder %v172, 0.0
  %vm239 = vcmp.ge.f32.partialorder %v173, 0.0
  %vm240 = vcmp.ge.f32.partialorder %v174, 0.0
  %vm241 = vcmp.ge.f32.partialorder %v175, 0.0
  %vm242 = vcmp.ge.f32.partialorder %v176, 0.0
  %vm243 = vcmp.ge.f32.partialorder %v177, 0.0
  %vm244 = vcmp.ge.f32.partialorder %v178, 0.0
  %vm245 = vcmp.ge.f32.partialorder %v179, 0.0
  %vm246 = vcmp.ge.f32.partialorder %v180, 0.0
  %vm247 = vcmp.ge.f32.partialorder %v181, 0.0
  %vm248 = vcmp.ge.f32.partialorder %v182, 0.0
  %vm249 = vcmp.ge.f32.partialorder %v183, 0.0
  %vm250 = vcmp.ge.f32.partialorder %v184, 0.0
  %vm251 = vcmp.ge.f32.partialorder %v185, 0.0
  %vm252 = vcmp.ge.f32.partialorder %v186, 0.0
  %vm253 = vcmp.ge.f32.partialorder %v187, 0.0
  %vm254 = vcmp.ge.f32.partialorder %v188, 0.0
  %vm255 = vcmp.ge.f32.partialorder %v189, 0.0
  %vm256 = vcmp.ge.f32.partialorder %v190, 0.0
  %vm257 = vcmp.ge.f32.partialorder %v191, 0.0
  %vm258 = vcmp.ge.f32.partialorder %v192, 0.0
  %vm259 = vcmp.ge.f32.partialorder %v193, 0.0
  %vm260 = vcmp.ge.f32.partialorder %v194, 0.0
  %vm261 = vcmp.ge.f32.partialorder %v195, 0.0
  %vm262 = vcmp.ge.f32.partialorder %v196, 0.0
  %vm263 = vcmp.ge.f32.partialorder %v197, 0.0
  %vm264 = vcmp.ge.f32.partialorder %v198, 0.0
  %vm265 = vcmp.ge.f32.partialorder %v199, 0.0
  %vm266 = vcmp.ge.f32.partialorder %v200, 0.0
  %vm267 = vcmp.ge.f32.partialorder %v201, 0.0
  %vm268 = vcmp.ge.f32.partialorder %v202, 0.0
  %vm269 = vcmp.ge.f32.partialorder %v203, 0.0
  %vm270 = vcmp.ge.f32.partialorder %v204, 0.0
  %vm271 = vcmp.ge.f32.partialorder %v205, 0.0
  %vm272 = vcmp.ge.f32.partialorder %v206, 0.0
  %vm273 = vcmp.ge.f32.partialorder %v207, 0.0
  %vm274 = vcmp.ge.f32.partialorder %v208, 0.0
  %vm275 = vcmp.ge.f32.partialorder %v209, 0.0
  %vm276 = vcmp.ge.f32.partialorder %v210, 0.0
  %vm277 = vcmp.ge.f32.partialorder %v211, 0.0
  %vm278 = vcmp.ge.f32.partialorder %v212, 0.0
  %vm279 = vcmp.ge.f32.partialorder %v213, 0.0
  %vm280 = vcmp.ge.f32.partialorder %v214, 0.0
  %vm281 = vcmp.ge.f32.partialorder %v215, 0.0
  %vm282 = vcmp.ge.f32.partialorder %v216, 0.0
  %vm283 = vcmp.ge.f32.partialorder %v217, 0.0
  %vm284 = vcmp.ge.f32.partialorder %v218, 0.0
  %vm285 = vcmp.ge.f32.partialorder %v219, 0.0
  %vm286 = vcmp.ge.f32.partialorder %v220, 0.0
  %vm287 = vcmp.ge.f32.partialorder %v221, 0.0
  %vm288 = vcmp.ge.f32.partialorder %v222, 0.0
  %vm289 = vcmp.ge.f32.partialorder %v223, 0.0
  %vm290 = vcmp.ge.f32.partialorder %v224, 0.0
  %v291 = vstv %s226
  %v292 = vmul.f32 %v291, %v161
  %v293 = vmul.f32 %v291, %v162
  %v294 = vmul.f32 %v291, %v163
  %v295 = vmul.f32 %v291, %v164
  %v296 = vmul.f32 %v291, %v165
  %v297 = vmul.f32 %v291, %v166
  %v298 = vmul.f32 %v291, %v167
  %v299 = vmul.f32 %v291, %v168
  %v300 = vmul.f32 %v291, %v169
  %v301 = vmul.f32 %v291, %v170
  %v302 = vmul.f32 %v291, %v171
  %v303 = vmul.f32 %v291, %v172
  %v304 = vmul.f32 %v291, %v173
  %v305 = vmul.f32 %v291, %v174
  %v306 = vmul.f32 %v291, %v175
  %v307 = vmul.f32 %v291, %v176
  %v308 = vmul.f32 %v291, %v177
  %v309 = vmul.f32 %v291, %v178
  %v310 = vmul.f32 %v291, %v179
  %v311 = vmul.f32 %v291, %v180
  %v312 = vmul.f32 %v291, %v181
  %v313 = vmul.f32 %v291, %v182
  %v314 = vmul.f32 %v291, %v183
  %v315 = vmul.f32 %v291, %v184
  %v316 = vmul.f32 %v291, %v185
  %v317 = vmul.f32 %v291, %v186
  %v318 = vmul.f32 %v291, %v187
  %v319 = vmul.f32 %v291, %v188
  %v320 = vmul.f32 %v291, %v189
  %v321 = vmul.f32 %v291, %v190
  %v322 = vmul.f32 %v291, %v191
  %v323 = vmul.f32 %v291, %v192
  %v324 = vmul.f32 %v291, %v193
  %v325 = vmul.f32 %v291, %v194
  %v326 = vmul.f32 %v291, %v195
  %v327 = vmul.f32 %v291, %v196
  %v328 = vmul.f32 %v291, %v197
  %v329 = vmul.f32 %v291, %v198
  %v330 = vmul.f32 %v291, %v199
  %v331 = vmul.f32 %v291, %v200
  %v332 = vmul.f32 %v291, %v201
  %v333 = vmul.f32 %v291, %v202
  %v334 = vmul.f32 %v291, %v203
  %v335 = vmul.f32 %v291, %v204
  %v336 = vmul.f32 %v291, %v205
  %v337 = vmul.f32 %v291, %v206
  %v338 = vmul.f32 %v291, %v207
  %v339 = vmul.f32 %v291, %v208
  %v340 = vmul.f32 %v291, %v209
  %v341 = vmul.f32 %v291, %v210
  %v342 = vmul.f32 %v291, %v211
  %v343 = vmul.f32 %v291, %v212
  %v344 = vmul.f32 %v291, %v213
  %v345 = vmul.f32 %v291, %v214
  %v346 = vmul.f32 %v291, %v215
  %v347 = vmul.f32 %v291, %v216
  %v348 = vmul.f32 %v291, %v217
  %v349 = vmul.f32 %v291, %v218
  %v350 = vmul.f32 %v291, %v219
  %v351 = vmul.f32 %v291, %v220
  %v352 = vmul.f32 %v291, %v221
  %v353 = vmul.f32 %v291, %v222
  %v354 = vmul.f32 %v291, %v223
  %v355 = vmul.f32 %v291, %v224
  %v356 = vsel %vm227, %v161, %v292
  %v357 = vsel %vm228, %v162, %v293
  %v358 = vsel %vm229, %v163, %v294
  %v359 = vsel %vm230, %v164, %v295
  %v360 = vsel %vm231, %v165, %v296
  %v361 = vsel %vm232, %v166, %v297
  %v362 = vsel %vm233, %v167, %v298
  %v363 = vsel %vm234, %v168, %v299
  %v364 = vsel %vm235, %v169, %v300
  %v365 = vsel %vm236, %v170, %v301
  %v366 = vsel %vm237, %v171, %v302
  %v367 = vsel %vm238, %v172, %v303
  %v368 = vsel %vm239, %v173, %v304
  %v369 = vsel %vm240, %v174, %v305
  %v370 = vsel %vm241, %v175, %v306
  %v371 = vsel %vm242, %v176, %v307
  %v372 = vsel %vm243, %v177, %v308
  %v373 = vsel %vm244, %v178, %v309
  %v374 = vsel %vm245, %v179, %v310
  %v375 = vsel %vm246, %v180, %v311
  %v376 = vsel %vm247, %v181, %v312
  %v377 = vsel %vm248, %v182, %v313
  %v378 = vsel %vm249, %v183, %v314
  %v379 = vsel %vm250, %v184, %v315
  %v380 = vsel %vm251, %v185, %v316
  %v381 = vsel %vm252, %v186, %v317
  %v382 = vsel %vm253, %v187, %v318
  %v383 = vsel %vm254, %v188, %v319
  %v384 = vsel %vm255, %v189, %v320
  %v385 = vsel %vm256, %v190, %v321
  %v386 = vsel %vm257, %v191, %v322
  %v387 = vsel %vm258, %v192, %v323
  %v388 = vsel %vm259, %v193, %v324
  %v389 = vsel %vm260, %v194, %v325
  %v390 = vsel %vm261, %v195, %v326
  %v391 = vsel %vm262, %v196, %v327
  %v392 = vsel %vm263, %v197, %v328
  %v393 = vsel %vm264, %v198, %v329
  %v394 = vsel %vm265, %v199, %v330
  %v395 = vsel %vm266, %v200, %v331
  %v396 = vsel %vm267, %v201, %v332
  %v397 = vsel %vm268, %v202, %v333
  %v398 = vsel %vm269, %v203, %v334
  %v399 = vsel %vm270, %v204, %v335
  %v400 = vsel %vm271, %v205, %v336
  %v401 = vsel %vm272, %v206, %v337
  %v402 = vsel %vm273, %v207, %v338
  %v403 = vsel %vm274, %v208, %v339
  %v404 = vsel %vm275, %v209, %v340
  %v405 = vsel %vm276, %v210, %v341
  %v406 = vsel %vm277, %v211, %v342
  %v407 = vsel %vm278, %v212, %v343
  %v408 = vsel %vm279, %v213, %v344
  %v409 = vsel %vm280, %v214, %v345
  %v410 = vsel %vm281, %v215, %v346
  %v411 = vsel %vm282, %v216, %v347
  %v412 = vsel %vm283, %v217, %v348
  %v413 = vsel %vm284, %v218, %v349
  %v414 = vsel %vm285, %v219, %v350
  %v415 = vsel %vm286, %v220, %v351
  %v416 = vsel %vm287, %v221, %v352
  %v417 = vsel %vm288, %v222, %v353
  %v418 = vsel %vm289, %v223, %v354
  %v419 = vsel %vm290, %v224, %v355
  %420 = vst [vmem:[%s4] sm:$0xff] %v356
  %421 = vst [vmem:[%s4 + $0x8] sm:$0xff] %v357
  %422 = vst [vmem:[%s4 + $0x10] sm:$0xff] %v358
  %423 = vst [vmem:[%s4 + $0x18] sm:$0xff] %v359
  %424 = vst [vmem:[%s4 + $0x20] sm:$0xff] %v360
  %425 = vst [vmem:[%s4 + $0x28] sm:$0xff] %v361
  %426 = vst [vmem:[%s4 + $0x30] sm:$0xff] %v362
  %427 = vst [vmem:[%s4 + $0x38] sm:$0xff] %v363
  %428 = vst [vmem:[%s4 + $0x40] sm:$0xff] %v364
  %429 = vst [vmem:[%s4 + $0x48] sm:$0xff] %v365
  %430 = vst [vmem:[%s4 + $0x50] sm:$0xff] %v366
  %431 = vst [vmem:[%s4 + $0x58] sm:$0xff] %v367
  %432 = vst [vmem:[%s4 + $0x60] sm:$0xff] %v368
  %433 = vst [vmem:[%s4 + $0x68] sm:$0xff] %v369
  %434 = vst [vmem:[%s4 + $0x70] sm:$0xff] %v370
  %435 = vst [vmem:[%s4 + $0x78] sm:$0xff] %v371
  %436 = vst [vmem:[%s4 + $0x80] sm:$0xff] %v372
  %437 = vst [vmem:[%s4 + $0x88] sm:$0xff] %v373
  %438 = vst [vmem:[%s4 + $0x90] sm:$0xff] %v374
  %439 = vst [vmem:[%s4 + $0x98] sm:$0xff] %v375
  %440 = vst [vmem:[%s4 + $0xa0] sm:$0xff] %v376
  %441 = vst [vmem:[%s4 + $0xa8] sm:$0xff] %v377
  %442 = vst [vmem:[%s4 + $0xb0] sm:$0xff] %v378
  %443 = vst [vmem:[%s4 + $0xb8] sm:$0xff] %v379
  %444 = vst [vmem:[%s4 + $0xc0] sm:$0xff] %v380
  %445 = vst [vmem:[%s4 + $0xc8] sm:$0xff] %v381
  %446 = vst [vmem:[%s4 + $0xd0] sm:$0xff] %v382
  %447 = vst [vmem:[%s4 + $0xd8] sm:$0xff] %v383
  %448 = vst [vmem:[%s4 + $0xe0] sm:$0xff] %v384
  %449 = vst [vmem:[%s4 + $0xe8] sm:$0xff] %v385
  %450 = vst [vmem:[%s4 + $0xf0] sm:$0xff] %v386
  %451 = vst [vmem:[%s4 + $0xf8] sm:$0xff] %v387
  %452 = vst [vmem:[%s4 + $0x100] sm:$0xff] %v388
  %453 = vst [vmem:[%s4 + $0x108] sm:$0xff] %v389
  %454 = vst [vmem:[%s4 + $0x110] sm:$0xff] %v390
  %455 = vst [vmem:[%s4 + $0x118] sm:$0xff] %v391
  %456 = vst [vmem:[%s4 + $0x120] sm:$0xff] %v392
  %457 = vst [vmem:[%s4 + $0x128] sm:$0xff] %v393
  %458 = vst [vmem:[%s4 + $0x130] sm:$0xff] %v394
  %459 = vst [vmem:[%s4 + $0x138] sm:$0xff] %v395
  %460 = vst [vmem:[%s4 + $0x140] sm:$0xff] %v396
  %461 = vst [vmem:[%s4 + $0x148] sm:$0xff] %v397
  %462 = vst [vmem:[%s4 + $0x150] sm:$0xff] %v398
  %463 = vst [vmem:[%s4 + $0x158] sm:$0xff] %v399
  %464 = vst [vmem:[%s4 + $0x160] sm:$0xff] %v400
  %465 = vst [vmem:[%s4 + $0x168] sm:$0xff] %v401
  %466 = vst [vmem:[%s4 + $0x170] sm:$0xff] %v402
  %467 = vst [vmem:[%s4 + $0x178] sm:$0xff] %v403
  %468 = vst [vmem:[%s4 + $0x180] sm:$0xff] %v404
  %469 = vst [vmem:[%s4 + $0x188] sm:$0xff] %v405
  %470 = vst [vmem:[%s4 + $0x190] sm:$0xff] %v406
  %471 = vst [vmem:[%s4 + $0x198] sm:$0xff] %v407
  %472 = vst [vmem:[%s4 + $0x1a0] sm:$0xff] %v408
  %473 = vst [vmem:[%s4 + $0x1a8] sm:$0xff] %v409
  %474 = vst [vmem:[%s4 + $0x1b0] sm:$0xff] %v410
  %475 = vst [vmem:[%s4 + $0x1b8] sm:$0xff] %v411
  %476 = vst [vmem:[%s4 + $0x1c0] sm:$0xff] %v412
  %477 = vst [vmem:[%s4 + $0x1c8] sm:$0xff] %v413
  %478 = vst [vmem:[%s4 + $0x1d0] sm:$0xff] %v414
  %479 = vst [vmem:[%s4 + $0x1d8] sm:$0xff] %v415
  %480 = vst [vmem:[%s4 + $0x1e0] sm:$0xff] %v416
  %481 = vst [vmem:[%s4 + $0x1e8] sm:$0xff] %v417
  %482 = vst [vmem:[%s4 + $0x1f0] sm:$0xff] %v418
  %483 = vst [vmem:[%s4 + $0x1f8] sm:$0xff] %v419
  // Predicated region
  $region18: #{conv_t_block.3} parent=0 // pred_check
    _
  $region19: #{conv_t_block.3} parent=0 // pred_check_branch
    %485 = sbr.rel (0) target = $region21
  $region20: #{conv_t_block.3} parent=0 // pred_region
    _
  $region21: #{conv_t_block.3} parent=0 // pred_fallthru
    _
  // Predicated region
  $region22: #{conv_t_block.3} parent=0 // pred_check
    _
  $region23: #{conv_t_block.3} parent=0 // pred_check_branch
    %487 = sbr.rel (0) target = $region25
  $region24: #{conv_t_block.3} parent=0 // pred_region
    _
  $region25: #{conv_t_block.3} parent=0 // pred_fallthru
    _

</llo_original>
